<compile_context>
chip_gen: v7x
topology: tpu7x:2x2x1
jax: 0.10.0
libtpu: 0.0.40
codegen_flags: <defaults>
</compile_context>

<pallas_src>
import functools

import jax
import jax.numpy as jnp
from jax.experimental import pallas as pl
from jax.experimental.pallas import tpu as pltpu

_FP = 128  # padded feature width: one full lane dimension


# ---------------------------------------------------------------------------
# Fused kernel: n_gin GINConv layers followed by n_mlp readout linears
# ---------------------------------------------------------------------------
def _gin_fused_kernel(*refs, n_gin, n_mlp):
    eps_ref, adj_ref, x_ref = refs[0], refs[1], refs[2]
    layer_refs = refs[3:3 + 6 * n_gin]
    mlp_refs = refs[3 + 6 * n_gin:3 + 6 * n_gin + 2 * n_mlp]
    out_ref = refs[-1]

    adj = adj_ref[...]                 # (N, N) bf16, values in {0, 1}
    h = x_ref[...]                     # (N, _FP) f32, zero-padded features

    for i in range(n_gin):
        w1, b1, w2, b2, gamma, beta = layer_refs[6 * i:6 * i + 6]

        # neighbor aggregation (dense torch.spmm) on the MXU: bf16 in, f32 acc
        agg = jnp.dot(adj, h.astype(jnp.bfloat16),
                      preferred_element_type=jnp.float32)
        h = agg + (1.0 + eps_ref[i]) * h          # GIN self term

        # 2-layer MLP: linear1 -> relu -> linear2
        h = jnp.dot(h, w1[...], preferred_element_type=jnp.float32) + b1[...]
        h = jnp.maximum(h, 0.0)
        h = jnp.dot(h, w2[...], preferred_element_type=jnp.float32) + b2[...]

        # BatchNorm1d over the node axis (training-mode batch statistics).
        # Padded feature columns are identically zero and stay zero.
        mean = jnp.mean(h, axis=0, keepdims=True)
        var = jnp.mean((h - mean) ** 2, axis=0, keepdims=True)
        h = (h - mean) * jax.lax.rsqrt(var + 1e-5)
        h = h * gamma[...] + beta[...]
        h = jnp.maximum(h, 0.0)

    for j in range(n_mlp):
        w, b = mlp_refs[2 * j:2 * j + 2]
        h = jnp.dot(h, w[...], preferred_element_type=jnp.float32) + b[...]
        if j != n_mlp - 1:
            h = jnp.maximum(h, 0.0)

    out_ref[...] = h   # lane-dense (N, 128) store; wrapper slices real columns


# ---------------------------------------------------------------------------
# Wrapper
# ---------------------------------------------------------------------------
_VMEM = pl.BlockSpec(memory_space=pltpu.MemorySpace.VMEM)
_SMEM = pl.BlockSpec(memory_space=pltpu.MemorySpace.SMEM)


def _pad2(a, rows, cols):
    a = a.astype(jnp.float32)
    return jnp.pad(a, ((0, rows - a.shape[0]), (0, cols - a.shape[1])))


def gin_forward(x, adj, params):
    """Full GIN forward. x: (N, F_in) f32, adj: (N, N) dense 0/1 -> (N, F_out)."""
    n = x.shape[0]
    assert n % 8 == 0, "node count must be sublane aligned (pad the graph)"
    gin_layers = params["gin_layers"]
    mlp_layers = params["mlp_layers"]
    n_gin, n_mlp = len(gin_layers), len(mlp_layers)
    out_features = mlp_layers[-1]["w"].shape[1]

    eps = jnp.concatenate([p["eps"] for p in gin_layers]).astype(jnp.float32)
    adj_bf16 = adj.astype(jnp.bfloat16)            # 0/1 entries -> lossless

    args = [eps, adj_bf16, _pad2(x, n, _FP)]
    in_specs = [_SMEM, _VMEM, _VMEM]
    for p in gin_layers:
        args += [_pad2(p["w1"], _FP, _FP), _pad2(p["b1"], 1, _FP),
                 _pad2(p["w2"], _FP, _FP), _pad2(p["b2"], 1, _FP),
                 _pad2(p["gamma"], 1, _FP), _pad2(p["beta"], 1, _FP)]
        in_specs += [_VMEM] * 6
    for p in mlp_layers:
        args += [_pad2(p["w"], _FP, _FP), _pad2(p["b"], 1, _FP)]
        in_specs += [_VMEM] * 2

    flops = (n_gin * (2 * n * n * _FP + 2 * 2 * n * _FP * _FP)
             + n_mlp * 2 * n * _FP * _FP)
    bytes_accessed = (2 * n * n                       # adj (bf16)
                      + 4 * n * _FP                   # x
                      + (6 * n_gin + 2 * n_mlp) * 4 * _FP * _FP  # params
                      + 4 * n * _FP)                  # out

    out_padded = pl.pallas_call(
        functools.partial(_gin_fused_kernel, n_gin=n_gin, n_mlp=n_mlp),
        out_shape=jax.ShapeDtypeStruct((n, _FP), jnp.float32),
        in_specs=in_specs,
        out_specs=_VMEM,
        cost_estimate=pl.CostEstimate(flops=flops, transcendentals=0,
                                      bytes_accessed=bytes_accessed),
        compiler_params=pltpu.CompilerParams(vmem_limit_bytes=64 << 20),
    )(*args)
    return out_padded[:, :out_features]


# ---------------------------------------------------------------------------
# Deterministic parameter initialization (mirrors the PyTorch module)
# ---------------------------------------------------------------------------
def _xavier_normal(key, fan_in, fan_out, gain):
    std = gain * (2.0 / (fan_in + fan_out)) ** 0.5
    return std * jax.random.normal(key, (fan_in, fan_out), jnp.float32)


def _uniform_bias(key, fan_in, fan_out):
    bound = 1.0 / (fan_in ** 0.5)
    return jax.random.uniform(key, (1, fan_out), jnp.float32, -bound, bound)


def _linear_default(key, fan_in, fan_out):
    # nn.Linear default init: kaiming_uniform(a=sqrt(5)) weight and uniform
    # bias, both with bound 1/sqrt(fan_in).
    kw, kb = jax.random.split(key)
    bound = 1.0 / (fan_in ** 0.5)
    w = jax.random.uniform(kw, (fan_in, fan_out), jnp.float32, -bound, bound)
    b = jax.random.uniform(kb, (1, fan_out), jnp.float32, -bound, bound)
    return w, b


def init_gin_params(key, in_features, out_features, hidden_features, n_layers,
                    n_mlp_layers=2, eps=0.0):
    if isinstance(hidden_features, int):
        hidden_features = [hidden_features] * (n_layers - 1)
    n_features = [in_features] + list(hidden_features) + [out_features]
    gain = 2.0 ** 0.5  # nn.init.calculate_gain('relu')

    params = {"gin_layers": [], "mlp_layers": []}
    for i in range(n_layers - 1):
        fi, fo = n_features[i], n_features[i + 1]
        key, k1, k2, k3, k4 = jax.random.split(key, 5)
        params["gin_layers"].append({
            "eps": jnp.array([eps], jnp.float32),
            "w1": _xavier_normal(k1, fi, fo, gain),
            "b1": _uniform_bias(k2, fi, fo),
            "w2": _xavier_normal(k3, fo, fo, gain),
            "b2": _uniform_bias(k4, fo, fo),
            "gamma": jnp.ones((1, fo), jnp.float32),   # BatchNorm1d weight
            "beta": jnp.zeros((1, fo), jnp.float32),   # BatchNorm1d bias
        })
    for i in range(n_mlp_layers):
        fi = hidden_features[-1]
        fo = out_features if i == n_mlp_layers - 1 else hidden_features[-1]
        key, kl = jax.random.split(key)
        w, b = _linear_default(kl, fi, fo)
        params["mlp_layers"].append({"w": w, "b": b})
    return params


# ---------------------------------------------------------------------------
# Pure-JAX reference (same math, f32) for a sanity check
# ---------------------------------------------------------------------------
def _reference_forward(x, adj, params):
    h = x
    for p in params["gin_layers"]:
        h = adj @ h + (1.0 + p["eps"][0]) * h
        h = jnp.maximum(h @ p["w1"] + p["b1"], 0.0)
        h = h @ p["w2"] + p["b2"]
        mean = jnp.mean(h, axis=0, keepdims=True)
        var = jnp.mean((h - mean) ** 2, axis=0, keepdims=True)
        h = (h - mean) * jax.lax.rsqrt(var + 1e-5)
        h = jnp.maximum(h * p["gamma"] + p["beta"], 0.0)
    n_mlp = len(params["mlp_layers"])
    for i, p in enumerate(params["mlp_layers"]):
        h = h @ p["w"] + p["b"]
        if i != n_mlp - 1:
            h = jnp.maximum(h, 0.0)
    return h


# ---------------------------------------------------------------------------
if __name__ == "__main__":
    key = jax.random.PRNGKey(0)

    N = 32                 # number of graph nodes
    in_features = 16
    hidden_features = 32
    out_features = 8
    n_layers = 3           # -> 2 GINConv layers: 16->32, 32->32
    n_mlp_layers = 2       # -> Linear(32,32) + Linear(32,8)

    k_x, k_adj, k_params = jax.random.split(key, 3)
    x = jax.random.normal(k_x, (N, in_features), jnp.float32)
    # symmetric binary adjacency with self-loops (dense stand-in for the
    # sparse tensor torch.spmm consumes; same math)
    a = (jax.random.uniform(k_adj, (N, N)) < 0.15).astype(jnp.float32)
    adj = jnp.clip(a + a.T + jnp.eye(N, dtype=jnp.float32), 0.0, 1.0)

    params = init_gin_params(k_params, in_features, out_features,
                             hidden_features, n_layers, n_mlp_layers, eps=0.0)

    out = gin_forward(x, adj, params)
    out = jax.block_until_ready(out)
    assert out.shape == (N, out_features), out.shape

    ref = _reference_forward(x, adj, params)
    max_err = float(jnp.max(jnp.abs(out - ref)))
    assert jnp.all(jnp.isfinite(out))
    assert max_err < 1e-1, f"max abs error vs reference: {max_err}"

    print("KERNEL_OK")
</pallas_src>

<mosaic_0001>
module attributes {stable_mosaic.version = 11 : i64} {
  func.func @_gin_fused_kernel(%arg0: memref<2xf32, #tpu.memory_space<smem>>, %arg1: memref<32x32xbf16, #tpu.memory_space<vmem>>, %arg2: memref<32x128xf32, #tpu.memory_space<vmem>>, %arg3: memref<128x128xf32, #tpu.memory_space<vmem>>, %arg4: memref<1x128xf32, #tpu.memory_space<vmem>>, %arg5: memref<128x128xf32, #tpu.memory_space<vmem>>, %arg6: memref<1x128xf32, #tpu.memory_space<vmem>>, %arg7: memref<1x128xf32, #tpu.memory_space<vmem>>, %arg8: memref<1x128xf32, #tpu.memory_space<vmem>>, %arg9: memref<128x128xf32, #tpu.memory_space<vmem>>, %arg10: memref<1x128xf32, #tpu.memory_space<vmem>>, %arg11: memref<128x128xf32, #tpu.memory_space<vmem>>, %arg12: memref<1x128xf32, #tpu.memory_space<vmem>>, %arg13: memref<1x128xf32, #tpu.memory_space<vmem>>, %arg14: memref<1x128xf32, #tpu.memory_space<vmem>>, %arg15: memref<128x128xf32, #tpu.memory_space<vmem>>, %arg16: memref<1x128xf32, #tpu.memory_space<vmem>>, %arg17: memref<128x128xf32, #tpu.memory_space<vmem>>, %arg18: memref<1x128xf32, #tpu.memory_space<vmem>>, %arg19: memref<32x128xf32, #tpu.memory_space<vmem>>) attributes {dimension_semantics = [], scalar_prefetch = 0 : i64, scratch_operands = 0 : i64, tpu.core_type = #tpu.core_type<tc>} {
    %c0 = arith.constant 0 : index
    %c0_0 = arith.constant 0 : index
    %0 = vector.load %arg1[%c0, %c0_0] : memref<32x32xbf16, #tpu.memory_space<vmem>>, vector<32x32xbf16>
    %c0_1 = arith.constant 0 : index
    %c0_2 = arith.constant 0 : index
    %1 = vector.load %arg2[%c0_1, %c0_2] : memref<32x128xf32, #tpu.memory_space<vmem>>, vector<32x128xf32>
    %2 = arith.truncf %1 : vector<32x128xf32> to vector<32x128xbf16>
    %cst = arith.constant dense<0.000000e+00> : vector<32x128xf32>
    %3 = tpu.matmul %0, %2, %cst {dimension_numbers = #tpu.dot_dimension_numbers<[1], [0], [0], [1], [0, 0, 1, 1], [], []>} : vector<32x32xbf16>, vector<32x128xbf16>, vector<32x128xf32> -> vector<32x128xf32>
    %c0_3 = arith.constant 0 : index
    %4 = memref.load %arg0[%c0_3] : memref<2xf32, #tpu.memory_space<smem>>
    %cst_4 = arith.constant 1.000000e+00 : f32
    %5 = arith.addf %cst_4, %4 : f32
    %6 = vector.broadcast %5 : f32 to vector<32x128xf32>
    %7 = arith.mulf %6, %1 : vector<32x128xf32>
    %8 = arith.addf %3, %7 : vector<32x128xf32>
    %c0_5 = arith.constant 0 : index
    %c0_6 = arith.constant 0 : index
    %9 = vector.load %arg3[%c0_5, %c0_6] : memref<128x128xf32, #tpu.memory_space<vmem>>, vector<128x128xf32>
    %cst_7 = arith.constant dense<0.000000e+00> : vector<32x128xf32>
    %10 = tpu.matmul %8, %9, %cst_7 {dimension_numbers = #tpu.dot_dimension_numbers<[1], [0], [0], [1], [0, 0, 1, 1], [], []>} : vector<32x128xf32>, vector<128x128xf32>, vector<32x128xf32> -> vector<32x128xf32>
    %c0_8 = arith.constant 0 : index
    %c0_9 = arith.constant 0 : index
    %11 = vector.load %arg4[%c0_8, %c0_9] : memref<1x128xf32, #tpu.memory_space<vmem>>, vector<1x128xf32>
    %12 = vector.broadcast %11 : vector<1x128xf32> to vector<32x128xf32>
    %13 = arith.addf %10, %12 : vector<32x128xf32>
    %cst_10 = arith.constant 0.000000e+00 : f32
    %14 = vector.broadcast %cst_10 : f32 to vector<32x128xf32>
    %15 = arith.maximumf %13, %14 : vector<32x128xf32>
    %c0_11 = arith.constant 0 : index
    %c0_12 = arith.constant 0 : index
    %16 = vector.load %arg5[%c0_11, %c0_12] : memref<128x128xf32, #tpu.memory_space<vmem>>, vector<128x128xf32>
    %cst_13 = arith.constant dense<0.000000e+00> : vector<32x128xf32>
    %17 = tpu.matmul %15, %16, %cst_13 {dimension_numbers = #tpu.dot_dimension_numbers<[1], [0], [0], [1], [0, 0, 1, 1], [], []>} : vector<32x128xf32>, vector<128x128xf32>, vector<32x128xf32> -> vector<32x128xf32>
    %c0_14 = arith.constant 0 : index
    %c0_15 = arith.constant 0 : index
    %18 = vector.load %arg6[%c0_14, %c0_15] : memref<1x128xf32, #tpu.memory_space<vmem>>, vector<1x128xf32>
    %19 = vector.broadcast %18 : vector<1x128xf32> to vector<32x128xf32>
    %20 = arith.addf %17, %19 : vector<32x128xf32>
    %cst_16 = arith.constant dense<0.000000e+00> : vector<128xf32>
    %21 = vector.multi_reduction <add>, %20, %cst_16 [0] : vector<32x128xf32> to vector<128xf32>
    %22 = vector.shape_cast %21 : vector<128xf32> to vector<1x128xf32>
    %cst_17 = arith.constant 3.200000e+01 : f32
    %23 = vector.broadcast %cst_17 : f32 to vector<1x128xf32>
    %24 = arith.divf %22, %23 : vector<1x128xf32>
    %25 = vector.broadcast %24 : vector<1x128xf32> to vector<32x128xf32>
    %26 = arith.subf %20, %25 : vector<32x128xf32>
    %27 = arith.mulf %26, %26 : vector<32x128xf32>
    %cst_18 = arith.constant dense<0.000000e+00> : vector<128xf32>
    %28 = vector.multi_reduction <add>, %27, %cst_18 [0] : vector<32x128xf32> to vector<128xf32>
    %29 = vector.shape_cast %28 : vector<128xf32> to vector<1x128xf32>
    %cst_19 = arith.constant 3.200000e+01 : f32
    %30 = vector.broadcast %cst_19 : f32 to vector<1x128xf32>
    %31 = arith.divf %29, %30 : vector<1x128xf32>
    %32 = vector.broadcast %24 : vector<1x128xf32> to vector<32x128xf32>
    %33 = arith.subf %20, %32 : vector<32x128xf32>
    %cst_20 = arith.constant 9.99999974E-6 : f32
    %34 = vector.broadcast %cst_20 : f32 to vector<1x128xf32>
    %35 = arith.addf %31, %34 : vector<1x128xf32>
    %36 = math.rsqrt %35 : vector<1x128xf32>
    %37 = vector.broadcast %36 : vector<1x128xf32> to vector<32x128xf32>
    %38 = arith.mulf %33, %37 : vector<32x128xf32>
    %c0_21 = arith.constant 0 : index
    %c0_22 = arith.constant 0 : index
    %39 = vector.load %arg7[%c0_21, %c0_22] : memref<1x128xf32, #tpu.memory_space<vmem>>, vector<1x128xf32>
    %40 = vector.broadcast %39 : vector<1x128xf32> to vector<32x128xf32>
    %41 = arith.mulf %38, %40 : vector<32x128xf32>
    %c0_23 = arith.constant 0 : index
    %c0_24 = arith.constant 0 : index
    %42 = vector.load %arg8[%c0_23, %c0_24] : memref<1x128xf32, #tpu.memory_space<vmem>>, vector<1x128xf32>
    %43 = vector.broadcast %42 : vector<1x128xf32> to vector<32x128xf32>
    %44 = arith.addf %41, %43 : vector<32x128xf32>
    %cst_25 = arith.constant 0.000000e+00 : f32
    %45 = vector.broadcast %cst_25 : f32 to vector<32x128xf32>
    %46 = arith.maximumf %44, %45 : vector<32x128xf32>
    %47 = arith.truncf %46 : vector<32x128xf32> to vector<32x128xbf16>
    %cst_26 = arith.constant dense<0.000000e+00> : vector<32x128xf32>
    %48 = tpu.matmul %0, %47, %cst_26 {dimension_numbers = #tpu.dot_dimension_numbers<[1], [0], [0], [1], [0, 0, 1, 1], [], []>} : vector<32x32xbf16>, vector<32x128xbf16>, vector<32x128xf32> -> vector<32x128xf32>
    %c1 = arith.constant 1 : index
    %49 = memref.load %arg0[%c1] : memref<2xf32, #tpu.memory_space<smem>>
    %cst_27 = arith.constant 1.000000e+00 : f32
    %50 = arith.addf %cst_27, %49 : f32
    %51 = vector.broadcast %50 : f32 to vector<32x128xf32>
    %52 = arith.mulf %51, %46 : vector<32x128xf32>
    %53 = arith.addf %48, %52 : vector<32x128xf32>
    %c0_28 = arith.constant 0 : index
    %c0_29 = arith.constant 0 : index
    %54 = vector.load %arg9[%c0_28, %c0_29] : memref<128x128xf32, #tpu.memory_space<vmem>>, vector<128x128xf32>
    %cst_30 = arith.constant dense<0.000000e+00> : vector<32x128xf32>
    %55 = tpu.matmul %53, %54, %cst_30 {dimension_numbers = #tpu.dot_dimension_numbers<[1], [0], [0], [1], [0, 0, 1, 1], [], []>} : vector<32x128xf32>, vector<128x128xf32>, vector<32x128xf32> -> vector<32x128xf32>
    %c0_31 = arith.constant 0 : index
    %c0_32 = arith.constant 0 : index
    %56 = vector.load %arg10[%c0_31, %c0_32] : memref<1x128xf32, #tpu.memory_space<vmem>>, vector<1x128xf32>
    %57 = vector.broadcast %56 : vector<1x128xf32> to vector<32x128xf32>
    %58 = arith.addf %55, %57 : vector<32x128xf32>
    %cst_33 = arith.constant 0.000000e+00 : f32
    %59 = vector.broadcast %cst_33 : f32 to vector<32x128xf32>
    %60 = arith.maximumf %58, %59 : vector<32x128xf32>
    %c0_34 = arith.constant 0 : index
    %c0_35 = arith.constant 0 : index
    %61 = vector.load %arg11[%c0_34, %c0_35] : memref<128x128xf32, #tpu.memory_space<vmem>>, vector<128x128xf32>
    %cst_36 = arith.constant dense<0.000000e+00> : vector<32x128xf32>
    %62 = tpu.matmul %60, %61, %cst_36 {dimension_numbers = #tpu.dot_dimension_numbers<[1], [0], [0], [1], [0, 0, 1, 1], [], []>} : vector<32x128xf32>, vector<128x128xf32>, vector<32x128xf32> -> vector<32x128xf32>
    %c0_37 = arith.constant 0 : index
    %c0_38 = arith.constant 0 : index
    %63 = vector.load %arg12[%c0_37, %c0_38] : memref<1x128xf32, #tpu.memory_space<vmem>>, vector<1x128xf32>
    %64 = vector.broadcast %63 : vector<1x128xf32> to vector<32x128xf32>
    %65 = arith.addf %62, %64 : vector<32x128xf32>
    %cst_39 = arith.constant dense<0.000000e+00> : vector<128xf32>
    %66 = vector.multi_reduction <add>, %65, %cst_39 [0] : vector<32x128xf32> to vector<128xf32>
    %67 = vector.shape_cast %66 : vector<128xf32> to vector<1x128xf32>
    %cst_40 = arith.constant 3.200000e+01 : f32
    %68 = vector.broadcast %cst_40 : f32 to vector<1x128xf32>
    %69 = arith.divf %67, %68 : vector<1x128xf32>
    %70 = vector.broadcast %69 : vector<1x128xf32> to vector<32x128xf32>
    %71 = arith.subf %65, %70 : vector<32x128xf32>
    %72 = arith.mulf %71, %71 : vector<32x128xf32>
    %cst_41 = arith.constant dense<0.000000e+00> : vector<128xf32>
    %73 = vector.multi_reduction <add>, %72, %cst_41 [0] : vector<32x128xf32> to vector<128xf32>
    %74 = vector.shape_cast %73 : vector<128xf32> to vector<1x128xf32>
    %cst_42 = arith.constant 3.200000e+01 : f32
    %75 = vector.broadcast %cst_42 : f32 to vector<1x128xf32>
    %76 = arith.divf %74, %75 : vector<1x128xf32>
    %77 = vector.broadcast %69 : vector<1x128xf32> to vector<32x128xf32>
    %78 = arith.subf %65, %77 : vector<32x128xf32>
    %cst_43 = arith.constant 9.99999974E-6 : f32
    %79 = vector.broadcast %cst_43 : f32 to vector<1x128xf32>
    %80 = arith.addf %76, %79 : vector<1x128xf32>
    %81 = math.rsqrt %80 : vector<1x128xf32>
    %82 = vector.broadcast %81 : vector<1x128xf32> to vector<32x128xf32>
    %83 = arith.mulf %78, %82 : vector<32x128xf32>
    %c0_44 = arith.constant 0 : index
    %c0_45 = arith.constant 0 : index
    %84 = vector.load %arg13[%c0_44, %c0_45] : memref<1x128xf32, #tpu.memory_space<vmem>>, vector<1x128xf32>
    %85 = vector.broadcast %84 : vector<1x128xf32> to vector<32x128xf32>
    %86 = arith.mulf %83, %85 : vector<32x128xf32>
    %c0_46 = arith.constant 0 : index
    %c0_47 = arith.constant 0 : index
    %87 = vector.load %arg14[%c0_46, %c0_47] : memref<1x128xf32, #tpu.memory_space<vmem>>, vector<1x128xf32>
    %88 = vector.broadcast %87 : vector<1x128xf32> to vector<32x128xf32>
    %89 = arith.addf %86, %88 : vector<32x128xf32>
    %cst_48 = arith.constant 0.000000e+00 : f32
    %90 = vector.broadcast %cst_48 : f32 to vector<32x128xf32>
    %91 = arith.maximumf %89, %90 : vector<32x128xf32>
    %c0_49 = arith.constant 0 : index
    %c0_50 = arith.constant 0 : index
    %92 = vector.load %arg15[%c0_49, %c0_50] : memref<128x128xf32, #tpu.memory_space<vmem>>, vector<128x128xf32>
    %cst_51 = arith.constant dense<0.000000e+00> : vector<32x128xf32>
    %93 = tpu.matmul %91, %92, %cst_51 {dimension_numbers = #tpu.dot_dimension_numbers<[1], [0], [0], [1], [0, 0, 1, 1], [], []>} : vector<32x128xf32>, vector<128x128xf32>, vector<32x128xf32> -> vector<32x128xf32>
    %c0_52 = arith.constant 0 : index
    %c0_53 = arith.constant 0 : index
    %94 = vector.load %arg16[%c0_52, %c0_53] : memref<1x128xf32, #tpu.memory_space<vmem>>, vector<1x128xf32>
    %95 = vector.broadcast %94 : vector<1x128xf32> to vector<32x128xf32>
    %96 = arith.addf %93, %95 : vector<32x128xf32>
    %cst_54 = arith.constant 0.000000e+00 : f32
    %97 = vector.broadcast %cst_54 : f32 to vector<32x128xf32>
    %98 = arith.maximumf %96, %97 : vector<32x128xf32>
    %c0_55 = arith.constant 0 : index
    %c0_56 = arith.constant 0 : index
    %99 = vector.load %arg17[%c0_55, %c0_56] : memref<128x128xf32, #tpu.memory_space<vmem>>, vector<128x128xf32>
    %cst_57 = arith.constant dense<0.000000e+00> : vector<32x128xf32>
    %100 = tpu.matmul %98, %99, %cst_57 {dimension_numbers = #tpu.dot_dimension_numbers<[1], [0], [0], [1], [0, 0, 1, 1], [], []>} : vector<32x128xf32>, vector<128x128xf32>, vector<32x128xf32> -> vector<32x128xf32>
    %c0_58 = arith.constant 0 : index
    %c0_59 = arith.constant 0 : index
    %101 = vector.load %arg18[%c0_58, %c0_59] : memref<1x128xf32, #tpu.memory_space<vmem>>, vector<1x128xf32>
    %102 = vector.broadcast %101 : vector<1x128xf32> to vector<32x128xf32>
    %103 = arith.addf %100, %102 : vector<32x128xf32>
    %c0_60 = arith.constant 0 : index
    %c0_61 = arith.constant 0 : index
    %104 = vector.load %arg19[%c0_60, %c0_61] : memref<32x128xf32, #tpu.memory_space<vmem>>, vector<32x128xf32>
    tpu.vector_store %arg19[%c0_60, %c0_61], %103 {strides = array<i32>} : memref<32x128xf32, #tpu.memory_space<vmem>>, vector<32x128xf32>,
    return
  }
}

</mosaic_0001>

<llo_original>
// kernel: tpu_custom_call.1
$region0: #{tpu_custom_call.1}
  #allocation0 [shape = 'u32[]', space=smem, size = 0x4, offset = 0x4, fixed_abs, tag = 'smem constant byte address 0x4 - core index']
  #allocation1 [shape = 'u32[144,128]{1,0:T(1,128)}', space=vmem, size = 0x12000, scoped, tag = 'internal scratch']
  %s0 = inlined_call_operand.hbm [shape: f32[2], index: 0, kind: input, shape index: {}]
  %s1 = inlined_call_operand.hbm [shape: bf16[32,32], index: 1, kind: input, shape index: {}]
  %s2 = inlined_call_operand.hbm [shape: f32[32,128], index: 2, kind: input, shape index: {}]
  %s3 = inlined_call_operand.hbm [shape: f32[128,128], index: 3, kind: input, shape index: {}]
  %s4 = inlined_call_operand.hbm [shape: f32[1,128], index: 4, kind: input, shape index: {}]
  %s5 = inlined_call_operand.hbm [shape: f32[128,128], index: 5, kind: input, shape index: {}]
  %s6 = inlined_call_operand.hbm [shape: f32[1,128], index: 6, kind: input, shape index: {}]
  %s7 = inlined_call_operand.hbm [shape: f32[1,128], index: 7, kind: input, shape index: {}]
  %s8 = inlined_call_operand.hbm [shape: f32[1,128], index: 8, kind: input, shape index: {}]
  %s9 = inlined_call_operand.hbm [shape: f32[128,128], index: 9, kind: input, shape index: {}]
  %s10 = inlined_call_operand.hbm [shape: f32[1,128], index: 10, kind: input, shape index: {}]
  %s11 = inlined_call_operand.hbm [shape: f32[128,128], index: 11, kind: input, shape index: {}]
  %s12 = inlined_call_operand.hbm [shape: f32[1,128], index: 12, kind: input, shape index: {}]
  %s13 = inlined_call_operand.hbm [shape: f32[1,128], index: 13, kind: input, shape index: {}]
  %s14 = inlined_call_operand.hbm [shape: f32[1,128], index: 14, kind: input, shape index: {}]
  %s15 = inlined_call_operand.hbm [shape: f32[128,128], index: 15, kind: input, shape index: {}]
  %s16 = inlined_call_operand.hbm [shape: f32[1,128], index: 16, kind: input, shape index: {}]
  %s17 = inlined_call_operand.hbm [shape: f32[128,128], index: 17, kind: input, shape index: {}]
  %s18 = inlined_call_operand.hbm [shape: f32[1,128], index: 18, kind: input, shape index: {}]
  %s19 = inlined_call_operand.hbm [shape: f32[32,128], index: 19, kind: output, shape index: {}]
  %s20 = sld [smem:[#allocation0]]
  $region162: #{tpu_custom_call.1} parent=0
    _
  %s22 = ssub.s32 1, %s20
  %s23 = scalar_select 0, %s22, %s20
  $region1: #{tpu_custom_call.1} parent=0
    #allocation2 [shape = 'u8[512]{0}', space=smem, size = 0x200, scoped, tag = 'input window, operand 0, single buffered']
    #allocation3 [shape = 's32[1]{0}', space=sflag, size = 0x4, scoped, tag = 'scoped memory for tpu_custom_call.1']
    #allocation4 [shape = 's32[1]{0}', space=sflag, size = 0x4, scoped, tag = 'scoped memory for tpu_custom_call.1']
    #allocation5 [shape = 's32[1]{0}', space=sflag, size = 0x4, scoped, tag = 'scoped memory for tpu_custom_call.1']
    #allocation6 [shape = 'u8[8192]{0}', space=vmem, size = 0x2000, scoped, tag = 'input window, operand 1, single buffered']
    #allocation7 [shape = 'u8[16384]{0}', space=vmem, size = 0x4000, scoped, tag = 'input window, operand 2, single buffered']
    #allocation8 [shape = 's32[1]{0}', space=sflag, size = 0x4, scoped, tag = 'scoped memory for tpu_custom_call.1']
    #allocation9 [shape = 'u8[65536]{0}', space=vmem, size = 0x10000, scoped, tag = 'input window, operand 3, single buffered']
    #allocation10 [shape = 'u8[512]{0}', space=vmem, size = 0x400, scoped, tag = 'input window, operand 4, single buffered']
    #allocation11 [shape = 's32[1]{0}', space=sflag, size = 0x4, scoped, tag = 'scoped memory for tpu_custom_call.1']
    #allocation12 [shape = 'u8[65536]{0}', space=vmem, size = 0x10000, scoped, tag = 'input window, operand 5, single buffered']
    #allocation13 [shape = 'u8[512]{0}', space=vmem, size = 0x400, scoped, tag = 'input window, operand 6, single buffered']
    #allocation14 [shape = 's32[1]{0}', space=sflag, size = 0x4, scoped, tag = 'scoped memory for tpu_custom_call.1']
    #allocation15 [shape = 'u8[512]{0}', space=vmem, size = 0x400, scoped, tag = 'input window, operand 7, single buffered']
    #allocation16 [shape = 'u8[512]{0}', space=vmem, size = 0x400, scoped, tag = 'input window, operand 8, single buffered']
    #allocation17 [shape = 's32[1]{0}', space=sflag, size = 0x4, scoped, tag = 'scoped memory for tpu_custom_call.1']
    #allocation18 [shape = 'u8[65536]{0}', space=vmem, size = 0x10000, scoped, tag = 'input window, operand 9, single buffered']
    #allocation19 [shape = 'u8[512]{0}', space=vmem, size = 0x400, scoped, tag = 'input window, operand 10, single buffered']
    #allocation20 [shape = 's32[1]{0}', space=sflag, size = 0x4, scoped, tag = 'scoped memory for tpu_custom_call.1']
    #allocation21 [shape = 'u8[65536]{0}', space=vmem, size = 0x10000, scoped, tag = 'input window, operand 11, single buffered']
    #allocation22 [shape = 'u8[512]{0}', space=vmem, size = 0x400, scoped, tag = 'input window, operand 12, single buffered']
    #allocation23 [shape = 's32[1]{0}', space=sflag, size = 0x4, scoped, tag = 'scoped memory for tpu_custom_call.1']
    #allocation24 [shape = 'u8[512]{0}', space=vmem, size = 0x400, scoped, tag = 'input window, operand 13, single buffered']
    #allocation25 [shape = 'u8[512]{0}', space=vmem, size = 0x400, scoped, tag = 'input window, operand 14, single buffered']
    #allocation26 [shape = 's32[1]{0}', space=sflag, size = 0x4, scoped, tag = 'scoped memory for tpu_custom_call.1']
    #allocation27 [shape = 'u8[65536]{0}', space=vmem, size = 0x10000, scoped, tag = 'input window, operand 15, single buffered']
    #allocation28 [shape = 'u8[512]{0}', space=vmem, size = 0x400, scoped, tag = 'input window, operand 16, single buffered']
    #allocation29 [shape = 's32[1]{0}', space=sflag, size = 0x4, scoped, tag = 'scoped memory for tpu_custom_call.1']
    #allocation30 [shape = 'u8[65536]{0}', space=vmem, size = 0x10000, scoped, tag = 'input window, operand 17, single buffered']
    #allocation31 [shape = 'u8[512]{0}', space=vmem, size = 0x400, scoped, tag = 'input window, operand 18, single buffered']
    #allocation32 [shape = 's32[1]{0}', space=sflag, size = 0x4, scoped, tag = 'scoped memory for tpu_custom_call.1']
    #allocation33 [shape = 'u8[16384]{0}', space=vmem, size = 0x4000, scoped, tag = 'output window, operand 0, single buffered']
    %24 = vsyncpa [#allocation5], 0
    %25 = vsyncpa [#allocation3], 0
    %26 = vsyncpa [#allocation8], 0
    %27 = vsyncpa [#allocation11], 0
    %28 = vsyncpa [#allocation14], 0
    %29 = vsyncpa [#allocation17], 0
    %30 = vsyncpa [#allocation20], 0
    %31 = vsyncpa [#allocation23], 0
    %32 = vsyncpa [#allocation26], 0
    %33 = vsyncpa [#allocation29], 0
    %34 = vsyncpa [#allocation32], 0
    %35 = vsyncpa [#allocation4], 0
    // Predicated region
    $region2: #{tpu_custom_call.1} parent=1 // pred_check
      _
    $region3: #{tpu_custom_call.1} parent=1 // pred_check_branch
      %37 = sbr.rel (0) target = $region5
    $region4: #{tpu_custom_call.1} parent=1 // pred_region
      %s39 = ssub.s32 16, 16
      %40 = vsyncadd [#allocation5], %s39
      %43 = dma.hbm_to_smem %s0, 16, [#allocation2], [#allocation5]
    $region5: #{tpu_custom_call.1} parent=1 // pred_fallthru
      _
    // Predicated region
    $region6: #{tpu_custom_call.1} parent=1 // pred_check
      _
    $region7: #{tpu_custom_call.1} parent=1 // pred_check_branch
      %45 = sbr.rel (0) target = $region9
    $region8: #{tpu_custom_call.1} parent=1 // pred_region
      %s47 = ssub.s32 256, 256
      %48 = vsyncadd [#allocation3], %s47
      %s49 = sshll.u32 [#allocation6], 4
      %s50 = int_to_ptr.vmem [resolvable:$true] %s49
      %55 = dma.hbm_to_vmem [thread:$0]  %s1, 256, %s50, [#allocation3], 64, 64, 4
    $region9: #{tpu_custom_call.1} parent=1 // pred_fallthru
      _
    // Predicated region
    $region10: #{tpu_custom_call.1} parent=1 // pred_check
      _
    $region11: #{tpu_custom_call.1} parent=1 // pred_check_branch
      %57 = sbr.rel (0) target = $region13
    $region12: #{tpu_custom_call.1} parent=1 // pred_region
      %s59 = ssub.s32 512, 512
      %60 = vsyncadd [#allocation8], %s59
      %s61 = sshll.u32 [#allocation7], 4
      %s62 = int_to_ptr.vmem [resolvable:$true] %s61
      %67 = dma.hbm_to_vmem [thread:$0]  %s2, 512, %s62, [#allocation8], 128, 128, 8
    $region13: #{tpu_custom_call.1} parent=1 // pred_fallthru
      _
    // Predicated region
    $region14: #{tpu_custom_call.1} parent=1 // pred_check
      _
    $region15: #{tpu_custom_call.1} parent=1 // pred_check_branch
      %69 = sbr.rel (0) target = $region17
    $region16: #{tpu_custom_call.1} parent=1 // pred_region
      %s71 = ssub.s32 2048, 2048
      %72 = vsyncadd [#allocation8], %s71
      %s73 = sshll.u32 [#allocation9], 4
      %s74 = int_to_ptr.vmem [resolvable:$true] %s73
      %79 = dma.hbm_to_vmem [thread:$0]  %s3, 2048, %s74, [#allocation8], 128, 128, 8
    $region17: #{tpu_custom_call.1} parent=1 // pred_fallthru
      _
    // Predicated region
    $region18: #{tpu_custom_call.1} parent=1 // pred_check
      _
    $region19: #{tpu_custom_call.1} parent=1 // pred_check_branch
      %81 = sbr.rel (0) target = $region21
    $region20: #{tpu_custom_call.1} parent=1 // pred_region
      %s83 = ssub.s32 16, 16
      %84 = vsyncadd [#allocation11], %s83
      %s86 = sshll.u32 [#allocation10], 4
      %s87 = int_to_ptr.vmem [resolvable:$true] %s86
      %89 = dma.hbm_to_vmem [thread:$0]  %s4, 16, %s87, [#allocation11]
    $region21: #{tpu_custom_call.1} parent=1 // pred_fallthru
      _
    // Predicated region
    $region22: #{tpu_custom_call.1} parent=1 // pred_check
      _
    $region23: #{tpu_custom_call.1} parent=1 // pred_check_branch
      %91 = sbr.rel (0) target = $region25
    $region24: #{tpu_custom_call.1} parent=1 // pred_region
      %s93 = ssub.s32 2048, 2048
      %94 = vsyncadd [#allocation11], %s93
      %s95 = sshll.u32 [#allocation12], 4
      %s96 = int_to_ptr.vmem [resolvable:$true] %s95
      %101 = dma.hbm_to_vmem [thread:$0]  %s5, 2048, %s96, [#allocation11], 128, 128, 8
    $region25: #{tpu_custom_call.1} parent=1 // pred_fallthru
      _
    // Predicated region
    $region26: #{tpu_custom_call.1} parent=1 // pred_check
      _
    $region27: #{tpu_custom_call.1} parent=1 // pred_check_branch
      %103 = sbr.rel (0) target = $region29
    $region28: #{tpu_custom_call.1} parent=1 // pred_region
      %s105 = ssub.s32 16, 16
      %106 = vsyncadd [#allocation14], %s105
      %s108 = sshll.u32 [#allocation13], 4
      %s109 = int_to_ptr.vmem [resolvable:$true] %s108
      %111 = dma.hbm_to_vmem [thread:$0]  %s6, 16, %s109, [#allocation14]
    $region29: #{tpu_custom_call.1} parent=1 // pred_fallthru
      _
    // Predicated region
    $region30: #{tpu_custom_call.1} parent=1 // pred_check
      _
    $region31: #{tpu_custom_call.1} parent=1 // pred_check_branch
      %113 = sbr.rel (0) target = $region33
    $region32: #{tpu_custom_call.1} parent=1 // pred_region
      %s115 = ssub.s32 16, 16
      %116 = vsyncadd [#allocation14], %s115
      %s118 = sshll.u32 [#allocation15], 4
      %s119 = int_to_ptr.vmem [resolvable:$true] %s118
      %121 = dma.hbm_to_vmem [thread:$0]  %s7, 16, %s119, [#allocation14]
    $region33: #{tpu_custom_call.1} parent=1 // pred_fallthru
      _
    // Predicated region
    $region34: #{tpu_custom_call.1} parent=1 // pred_check
      _
    $region35: #{tpu_custom_call.1} parent=1 // pred_check_branch
      %123 = sbr.rel (0) target = $region37
    $region36: #{tpu_custom_call.1} parent=1 // pred_region
      %s125 = ssub.s32 16, 16
      %126 = vsyncadd [#allocation17], %s125
      %s128 = sshll.u32 [#allocation16], 4
      %s129 = int_to_ptr.vmem [resolvable:$true] %s128
      %131 = dma.hbm_to_vmem [thread:$0]  %s8, 16, %s129, [#allocation17]
    $region37: #{tpu_custom_call.1} parent=1 // pred_fallthru
      _
    // Predicated region
    $region38: #{tpu_custom_call.1} parent=1 // pred_check
      _
    $region39: #{tpu_custom_call.1} parent=1 // pred_check_branch
      %133 = sbr.rel (0) target = $region41
    $region40: #{tpu_custom_call.1} parent=1 // pred_region
      %s135 = ssub.s32 2048, 2048
      %136 = vsyncadd [#allocation17], %s135
      %s137 = sshll.u32 [#allocation18], 4
      %s138 = int_to_ptr.vmem [resolvable:$true] %s137
      %143 = dma.hbm_to_vmem [thread:$0]  %s9, 2048, %s138, [#allocation17], 128, 128, 8
    $region41: #{tpu_custom_call.1} parent=1 // pred_fallthru
      _
    // Predicated region
    $region42: #{tpu_custom_call.1} parent=1 // pred_check
      _
    $region43: #{tpu_custom_call.1} parent=1 // pred_check_branch
      %145 = sbr.rel (0) target = $region45
    $region44: #{tpu_custom_call.1} parent=1 // pred_region
      %s147 = ssub.s32 16, 16
      %148 = vsyncadd [#allocation20], %s147
      %s150 = sshll.u32 [#allocation19], 4
      %s151 = int_to_ptr.vmem [resolvable:$true] %s150
      %153 = dma.hbm_to_vmem [thread:$0]  %s10, 16, %s151, [#allocation20]
    $region45: #{tpu_custom_call.1} parent=1 // pred_fallthru
      _
    // Predicated region
    $region46: #{tpu_custom_call.1} parent=1 // pred_check
      _
    $region47: #{tpu_custom_call.1} parent=1 // pred_check_branch
      %155 = sbr.rel (0) target = $region49
    $region48: #{tpu_custom_call.1} parent=1 // pred_region
      %s157 = ssub.s32 2048, 2048
      %158 = vsyncadd [#allocation20], %s157
      %s159 = sshll.u32 [#allocation21], 4
      %s160 = int_to_ptr.vmem [resolvable:$true] %s159
      %165 = dma.hbm_to_vmem [thread:$0]  %s11, 2048, %s160, [#allocation20], 128, 128, 8
    $region49: #{tpu_custom_call.1} parent=1 // pred_fallthru
      _
    // Predicated region
    $region50: #{tpu_custom_call.1} parent=1 // pred_check
      _
    $region51: #{tpu_custom_call.1} parent=1 // pred_check_branch
      %167 = sbr.rel (0) target = $region53
    $region52: #{tpu_custom_call.1} parent=1 // pred_region
      %s169 = ssub.s32 16, 16
      %170 = vsyncadd [#allocation23], %s169
      %s172 = sshll.u32 [#allocation22], 4
      %s173 = int_to_ptr.vmem [resolvable:$true] %s172
      %175 = dma.hbm_to_vmem [thread:$0]  %s12, 16, %s173, [#allocation23]
    $region53: #{tpu_custom_call.1} parent=1 // pred_fallthru
      _
    // Predicated region
    $region54: #{tpu_custom_call.1} parent=1 // pred_check
      _
    $region55: #{tpu_custom_call.1} parent=1 // pred_check_branch
      %177 = sbr.rel (0) target = $region57
    $region56: #{tpu_custom_call.1} parent=1 // pred_region
      %s179 = ssub.s32 16, 16
      %180 = vsyncadd [#allocation23], %s179
      %s182 = sshll.u32 [#allocation24], 4
      %s183 = int_to_ptr.vmem [resolvable:$true] %s182
      %185 = dma.hbm_to_vmem [thread:$0]  %s13, 16, %s183, [#allocation23]
    $region57: #{tpu_custom_call.1} parent=1 // pred_fallthru
      _
    // Predicated region
    $region58: #{tpu_custom_call.1} parent=1 // pred_check
      _
    $region59: #{tpu_custom_call.1} parent=1 // pred_check_branch
      %187 = sbr.rel (0) target = $region61
    $region60: #{tpu_custom_call.1} parent=1 // pred_region
      %s189 = ssub.s32 16, 16
      %190 = vsyncadd [#allocation26], %s189
      %s192 = sshll.u32 [#allocation25], 4
      %s193 = int_to_ptr.vmem [resolvable:$true] %s192
      %195 = dma.hbm_to_vmem [thread:$0]  %s14, 16, %s193, [#allocation26]
    $region61: #{tpu_custom_call.1} parent=1 // pred_fallthru
      _
    // Predicated region
    $region62: #{tpu_custom_call.1} parent=1 // pred_check
      _
    $region63: #{tpu_custom_call.1} parent=1 // pred_check_branch
      %197 = sbr.rel (0) target = $region65
    $region64: #{tpu_custom_call.1} parent=1 // pred_region
      %s199 = ssub.s32 2048, 2048
      %200 = vsyncadd [#allocation26], %s199
      %s201 = sshll.u32 [#allocation27], 4
      %s202 = int_to_ptr.vmem [resolvable:$true] %s201
      %207 = dma.hbm_to_vmem [thread:$0]  %s15, 2048, %s202, [#allocation26], 128, 128, 8
    $region65: #{tpu_custom_call.1} parent=1 // pred_fallthru
      _
    // Predicated region
    $region66: #{tpu_custom_call.1} parent=1 // pred_check
      _
    $region67: #{tpu_custom_call.1} parent=1 // pred_check_branch
      %209 = sbr.rel (0) target = $region69
    $region68: #{tpu_custom_call.1} parent=1 // pred_region
      %s211 = ssub.s32 16, 16
      %212 = vsyncadd [#allocation29], %s211
      %s214 = sshll.u32 [#allocation28], 4
      %s215 = int_to_ptr.vmem [resolvable:$true] %s214
      %217 = dma.hbm_to_vmem [thread:$0]  %s16, 16, %s215, [#allocation29]
    $region69: #{tpu_custom_call.1} parent=1 // pred_fallthru
      _
    // Predicated region
    $region70: #{tpu_custom_call.1} parent=1 // pred_check
      _
    $region71: #{tpu_custom_call.1} parent=1 // pred_check_branch
      %219 = sbr.rel (0) target = $region73
    $region72: #{tpu_custom_call.1} parent=1 // pred_region
      %s221 = ssub.s32 2048, 2048
      %222 = vsyncadd [#allocation29], %s221
      %s223 = sshll.u32 [#allocation30], 4
      %s224 = int_to_ptr.vmem [resolvable:$true] %s223
      %229 = dma.hbm_to_vmem [thread:$0]  %s17, 2048, %s224, [#allocation29], 128, 128, 8
    $region73: #{tpu_custom_call.1} parent=1 // pred_fallthru
      _
    // Predicated region
    $region74: #{tpu_custom_call.1} parent=1 // pred_check
      _
    $region75: #{tpu_custom_call.1} parent=1 // pred_check_branch
      %231 = sbr.rel (0) target = $region77
    $region76: #{tpu_custom_call.1} parent=1 // pred_region
      %s233 = ssub.s32 16, 16
      %234 = vsyncadd [#allocation32], %s233
      %s236 = sshll.u32 [#allocation31], 4
      %s237 = int_to_ptr.vmem [resolvable:$true] %s236
      %239 = dma.hbm_to_vmem [thread:$0]  %s18, 16, %s237, [#allocation32]
    $region77: #{tpu_custom_call.1} parent=1 // pred_fallthru
      _
    // Predicated region
    $region78: #{tpu_custom_call.1} parent=1 // pred_check
      _
    $region79: #{tpu_custom_call.1} parent=1 // pred_check_branch
      %241 = sbr.rel (0) target = $region81
    $region80: #{tpu_custom_call.1} parent=1 // pred_region
      %242 = dma.done [#allocation5], 16
    $region81: #{tpu_custom_call.1} parent=1 // pred_fallthru
      _
    // Predicated region
    $region82: #{tpu_custom_call.1} parent=1 // pred_check
      _
    $region83: #{tpu_custom_call.1} parent=1 // pred_check_branch
      %244 = sbr.rel (0) target = $region85
    $region84: #{tpu_custom_call.1} parent=1 // pred_region
      %245 = dma.done [#allocation3], 256
    $region85: #{tpu_custom_call.1} parent=1 // pred_fallthru
      _
    // Predicated region
    $region86: #{tpu_custom_call.1} parent=1 // pred_check
      _
    $region87: #{tpu_custom_call.1} parent=1 // pred_check_branch
      %247 = sbr.rel (0) target = $region89
    $region88: #{tpu_custom_call.1} parent=1 // pred_region
      %248 = dma.done [#allocation8], 512
    $region89: #{tpu_custom_call.1} parent=1 // pred_fallthru
      _
    // Predicated region
    $region90: #{tpu_custom_call.1} parent=1 // pred_check
      _
    $region91: #{tpu_custom_call.1} parent=1 // pred_check_branch
      %250 = sbr.rel (0) target = $region93
    $region92: #{tpu_custom_call.1} parent=1 // pred_region
      %251 = dma.done [#allocation8], 2048
    $region93: #{tpu_custom_call.1} parent=1 // pred_fallthru
      _
    // Predicated region
    $region94: #{tpu_custom_call.1} parent=1 // pred_check
      _
    $region95: #{tpu_custom_call.1} parent=1 // pred_check_branch
      %253 = sbr.rel (0) target = $region97
    $region96: #{tpu_custom_call.1} parent=1 // pred_region
      %254 = dma.done [#allocation11], 16
    $region97: #{tpu_custom_call.1} parent=1 // pred_fallthru
      _
    // Predicated region
    $region98: #{tpu_custom_call.1} parent=1 // pred_check
      _
    $region99: #{tpu_custom_call.1} parent=1 // pred_check_branch
      %256 = sbr.rel (0) target = $region101
    $region100: #{tpu_custom_call.1} parent=1 // pred_region
      %257 = dma.done [#allocation11], 2048
    $region101: #{tpu_custom_call.1} parent=1 // pred_fallthru
      _
    // Predicated region
    $region102: #{tpu_custom_call.1} parent=1 // pred_check
      _
    $region103: #{tpu_custom_call.1} parent=1 // pred_check_branch
      %259 = sbr.rel (0) target = $region105
    $region104: #{tpu_custom_call.1} parent=1 // pred_region
      %260 = dma.done [#allocation14], 16
    $region105: #{tpu_custom_call.1} parent=1 // pred_fallthru
      _
    // Predicated region
    $region106: #{tpu_custom_call.1} parent=1 // pred_check
      _
    $region107: #{tpu_custom_call.1} parent=1 // pred_check_branch
      %262 = sbr.rel (0) target = $region109
    $region108: #{tpu_custom_call.1} parent=1 // pred_region
      %263 = dma.done [#allocation14], 16
    $region109: #{tpu_custom_call.1} parent=1 // pred_fallthru
      _
    // Predicated region
    $region110: #{tpu_custom_call.1} parent=1 // pred_check
      _
    $region111: #{tpu_custom_call.1} parent=1 // pred_check_branch
      %265 = sbr.rel (0) target = $region113
    $region112: #{tpu_custom_call.1} parent=1 // pred_region
      %266 = dma.done [#allocation17], 16
    $region113: #{tpu_custom_call.1} parent=1 // pred_fallthru
      _
    // Predicated region
    $region114: #{tpu_custom_call.1} parent=1 // pred_check
      _
    $region115: #{tpu_custom_call.1} parent=1 // pred_check_branch
      %268 = sbr.rel (0) target = $region117
    $region116: #{tpu_custom_call.1} parent=1 // pred_region
      %269 = dma.done [#allocation17], 2048
    $region117: #{tpu_custom_call.1} parent=1 // pred_fallthru
      _
    // Predicated region
    $region118: #{tpu_custom_call.1} parent=1 // pred_check
      _
    $region119: #{tpu_custom_call.1} parent=1 // pred_check_branch
      %271 = sbr.rel (0) target = $region121
    $region120: #{tpu_custom_call.1} parent=1 // pred_region
      %272 = dma.done [#allocation20], 16
    $region121: #{tpu_custom_call.1} parent=1 // pred_fallthru
      _
    // Predicated region
    $region122: #{tpu_custom_call.1} parent=1 // pred_check
      _
    $region123: #{tpu_custom_call.1} parent=1 // pred_check_branch
      %274 = sbr.rel (0) target = $region125
    $region124: #{tpu_custom_call.1} parent=1 // pred_region
      %275 = dma.done [#allocation20], 2048
    $region125: #{tpu_custom_call.1} parent=1 // pred_fallthru
      _
    // Predicated region
    $region126: #{tpu_custom_call.1} parent=1 // pred_check
      _
    $region127: #{tpu_custom_call.1} parent=1 // pred_check_branch
      %277 = sbr.rel (0) target = $region129
    $region128: #{tpu_custom_call.1} parent=1 // pred_region
      %278 = dma.done [#allocation23], 16
    $region129: #{tpu_custom_call.1} parent=1 // pred_fallthru
      _
    // Predicated region
    $region130: #{tpu_custom_call.1} parent=1 // pred_check
      _
    $region131: #{tpu_custom_call.1} parent=1 // pred_check_branch
      %280 = sbr.rel (0) target = $region133
    $region132: #{tpu_custom_call.1} parent=1 // pred_region
      %281 = dma.done [#allocation23], 16
    $region133: #{tpu_custom_call.1} parent=1 // pred_fallthru
      _
    // Predicated region
    $region134: #{tpu_custom_call.1} parent=1 // pred_check
      _
    $region135: #{tpu_custom_call.1} parent=1 // pred_check_branch
      %283 = sbr.rel (0) target = $region137
    $region136: #{tpu_custom_call.1} parent=1 // pred_region
      %284 = dma.done [#allocation26], 16
    $region137: #{tpu_custom_call.1} parent=1 // pred_fallthru
      _
    // Predicated region
    $region138: #{tpu_custom_call.1} parent=1 // pred_check
      _
    $region139: #{tpu_custom_call.1} parent=1 // pred_check_branch
      %286 = sbr.rel (0) target = $region141
    $region140: #{tpu_custom_call.1} parent=1 // pred_region
      %287 = dma.done [#allocation26], 2048
    $region141: #{tpu_custom_call.1} parent=1 // pred_fallthru
      _
    // Predicated region
    $region142: #{tpu_custom_call.1} parent=1 // pred_check
      _
    $region143: #{tpu_custom_call.1} parent=1 // pred_check_branch
      %289 = sbr.rel (0) target = $region145
    $region144: #{tpu_custom_call.1} parent=1 // pred_region
      %290 = dma.done [#allocation29], 16
    $region145: #{tpu_custom_call.1} parent=1 // pred_fallthru
      _
    // Predicated region
    $region146: #{tpu_custom_call.1} parent=1 // pred_check
      _
    $region147: #{tpu_custom_call.1} parent=1 // pred_check_branch
      %292 = sbr.rel (0) target = $region149
    $region148: #{tpu_custom_call.1} parent=1 // pred_region
      %293 = dma.done [#allocation29], 2048
    $region149: #{tpu_custom_call.1} parent=1 // pred_fallthru
      _
    // Predicated region
    $region150: #{tpu_custom_call.1} parent=1 // pred_check
      _
    $region151: #{tpu_custom_call.1} parent=1 // pred_check_branch
      %295 = sbr.rel (0) target = $region153
    $region152: #{tpu_custom_call.1} parent=1 // pred_region
      %296 = dma.done [#allocation32], 16
    $region153: #{tpu_custom_call.1} parent=1 // pred_fallthru
      _
    %297 = sfence
    %v299 = vld [vmem:[#allocation6] sm:$0xf]
    %v300 = vld [vmem:[#allocation6 + $0x4] sm:$0xf]
    %v301 = vld [vmem:[#allocation6 + $0x8] sm:$0xf]
    %v302 = vld [vmem:[#allocation6 + $0xc] sm:$0xf]
    %v303 = vld [vmem:[#allocation7] sm:$0xff]
    %v304 = vld [vmem:[#allocation7 + $0x8] sm:$0xff]
    %v305 = vld [vmem:[#allocation7 + $0x10] sm:$0xff]
    %v306 = vld [vmem:[#allocation7 + $0x18] sm:$0xff]
    %v307 = vpack.c.bf16 %v304, %v303
    %v308 = vpack.c.bf16 %v306, %v305
    %s309 = sld [smem:[#allocation2]]
    %s310 = sadd.f32 %s309, 1.0
    %v311 = vstv %s310
    %v312 = vmul.f32 %v311, %v303
    %v313 = vmul.f32 %v311, %v304
    %v314 = vmul.f32 %v311, %v305
    %v315 = vmul.f32 %v311, %v306
    %v320 = vunpack.c.l.b16 %v299
    %v321 = vunpack.c.l.b16 %v300
    %v322 = vunpack.c.l.b16 %v301
    %v323 = vunpack.c.l.b16 %v302
    %v324 = vpack.c.b16 %v321, %v320
    %v325 = vpack.c.b16 %v323, %v322
    %vm326 = vcmask 261120
    %v328 = vsel %vm326, %v324, 0
    %v331 = vsel %vm326, %v325, 0
    %333 = vmatprep.subr.bf16.mxu0 0
    %334 = vmatpush1.bf16.msra.mxu0 %v307
    %335 = vmatprep.subr.bf16.mxu0 0
    %336 = vmatpush1.bf16.msra.mxu0 %v308
    %337 = vmatprep.subr.bf16.mxu0 0
    %338 = vmatpush1.bf16.msra.mxu0 0
    %339 = vmatprep.subr.bf16.mxu0 0
    %340 = vmatpush1.bf16.msra.mxu0 0
    %341 = vmatprep.subr.bf16.mxu0 0
    %342 = vmatpush1.bf16.msra.mxu0 0
    %343 = vmatprep.subr.bf16.mxu0 0
    %344 = vmatpush1.bf16.msra.mxu0 0
    %345 = vmatprep.subr.bf16.mxu0 0
    %346 = vmatpush1.bf16.msra.mxu0 0
    %347 = vmatprep.subr.bf16.mxu0 0
    %348 = vmatpush1.bf16.msra.mxu0 0
    %349 = vmatprep.subr.bf16.mxu0 0
    %350 = vmatpush1.bf16.msra.mxu0 0
    %351 = vmatprep.subr.bf16.mxu0 0
    %352 = vmatpush1.bf16.msra.mxu0 0
    %353 = vmatprep.subr.bf16.mxu0 0
    %354 = vmatpush1.bf16.msra.mxu0 0
    %355 = vmatprep.subr.bf16.mxu0 0
    %356 = vmatpush1.bf16.msra.mxu0 0
    %357 = vmatprep.subr.bf16.mxu0 0
    %358 = vmatpush1.bf16.msra.mxu0 0
    %359 = vmatprep.subr.bf16.mxu0 0
    %360 = vmatpush1.bf16.msra.mxu0 0
    %361 = vmatprep.subr.bf16.mxu0 0
    %362 = vmatpush1.bf16.msra.mxu0 0
    %363 = vmatprep.subr.bf16.mxu0 0
    %364 = vmatpush1.bf16.msra.mxu0 0
    %365 = vmatprep.mubr.bf16.mxu0 0
    %366 = vmatmul.mubr.bf16.gmra.mrb[0].mxu0 %v328
    %v367 = vpop.f32.mrb[0].mxu0
    %v368 = vadd.f32 %v312, %v367
    %v369 = vpop.f32.mrb[0].mxu0
    %v370 = vpop.f32.mrb[0].mxu0
    %v371 = vadd.f32 %v313, %v370
    %v372 = vpop.f32.mrb[0].mxu0
    %373 = vmatprep.mubr.bf16.mxu0 0
    %374 = vmatmul.mubr.bf16.gmra.mrb[0].mxu0 %v331
    %v375 = vpop.f32.mrb[0].mxu0
    %v376 = vadd.f32 %v314, %v375
    %v377 = vpop.f32.mrb[0].mxu0
    %v378 = vpop.f32.mrb[0].mxu0
    %v379 = vadd.f32 %v315, %v378
    %v380 = vpop.f32.mrb[0].mxu0
    %381 = vdwg.mxu0
    %v382 = vld [vmem:[#allocation9] sm:$0xff]
    %v383 = vld [vmem:[#allocation9 + $0x8] sm:$0xff]
    %v384 = vld [vmem:[#allocation9 + $0x10] sm:$0xff]
    %v385 = vld [vmem:[#allocation9 + $0x18] sm:$0xff]
    %v386 = vld [vmem:[#allocation9 + $0x20] sm:$0xff]
    %v387 = vld [vmem:[#allocation9 + $0x28] sm:$0xff]
    %v388 = vld [vmem:[#allocation9 + $0x30] sm:$0xff]
    %v389 = vld [vmem:[#allocation9 + $0x38] sm:$0xff]
    %v390 = vld [vmem:[#allocation9 + $0x40] sm:$0xff]
    %v391 = vld [vmem:[#allocation9 + $0x48] sm:$0xff]
    %v392 = vld [vmem:[#allocation9 + $0x50] sm:$0xff]
    %v393 = vld [vmem:[#allocation9 + $0x58] sm:$0xff]
    %v394 = vld [vmem:[#allocation9 + $0x60] sm:$0xff]
    %v395 = vld [vmem:[#allocation9 + $0x68] sm:$0xff]
    %v396 = vld [vmem:[#allocation9 + $0x70] sm:$0xff]
    %v397 = vld [vmem:[#allocation9 + $0x78] sm:$0xff]
    %v398 = vld [vmem:[#allocation10] sm:$0x1]
    %v400 = vlaneseq
    %v401 = vshrl.u32 %v400, 7
    %v402 = vsub.s32 0, %v401
    %v403 = vrot.slane %v398, %v402
    %405 = vmatprep.subr.mxu0 0.0
    %406 = vmatpush1.msra.mxu0 %v382
    %407 = vmatprep.subr.mxu0 0.0
    %408 = vmatpush1.msra.mxu0 %v383
    %409 = vmatprep.subr.mxu0 0.0
    %410 = vmatpush1.msra.mxu0 %v384
    %411 = vmatprep.subr.mxu0 0.0
    %412 = vmatpush1.msra.mxu0 %v385
    %413 = vmatprep.subr.mxu0 0.0
    %414 = vmatpush1.msra.mxu0 %v386
    %415 = vmatprep.subr.mxu0 0.0
    %416 = vmatpush1.msra.mxu0 %v387
    %417 = vmatprep.subr.mxu0 0.0
    %418 = vmatpush1.msra.mxu0 %v388
    %419 = vmatprep.subr.mxu0 0.0
    %420 = vmatpush1.msra.mxu0 %v389
    %421 = vmatprep.subr.mxu0 0.0
    %422 = vmatpush1.msra.mxu0 %v390
    %423 = vmatprep.subr.mxu0 0.0
    %424 = vmatpush1.msra.mxu0 %v391
    %425 = vmatprep.subr.mxu0 0.0
    %426 = vmatpush1.msra.mxu0 %v392
    %427 = vmatprep.subr.mxu0 0.0
    %428 = vmatpush1.msra.mxu0 %v393
    %429 = vmatprep.subr.mxu0 0.0
    %430 = vmatpush1.msra.mxu0 %v394
    %431 = vmatprep.subr.mxu0 0.0
    %432 = vmatpush1.msra.mxu0 %v395
    %433 = vmatprep.subr.mxu0 0.0
    %434 = vmatpush1.msra.mxu0 %v396
    %435 = vmatprep.subr.mxu0 0.0
    %436 = vmatpush1.msra.mxu0 %v397
    %437 = vmatprep.subr.mxu0 0.0
    %438 = vmatpush1.msra.mxu0 0.0
    %439 = vmatprep.subr.mxu0 0.0
    %440 = vmatpush1.msra.mxu0 0.0
    %441 = vmatprep.subr.mxu0 0.0
    %442 = vmatpush1.msra.mxu0 0.0
    %443 = vmatprep.subr.mxu0 0.0
    %444 = vmatpush1.msra.mxu0 0.0
    %445 = vmatprep.subr.mxu0 0.0
    %446 = vmatpush1.msra.mxu0 0.0
    %447 = vmatprep.subr.mxu0 0.0
    %448 = vmatpush1.msra.mxu0 0.0
    %449 = vmatprep.subr.mxu0 0.0
    %450 = vmatpush1.msra.mxu0 0.0
    %451 = vmatprep.subr.mxu0 0.0
    %452 = vmatpush1.msra.mxu0 0.0
    %453 = vmatprep.subr.mxu0 0.0
    %454 = vmatpush1.msra.mxu0 0.0
    %455 = vmatprep.subr.mxu0 0.0
    %456 = vmatpush1.msra.mxu0 0.0
    %457 = vmatprep.subr.mxu0 0.0
    %458 = vmatpush1.msra.mxu0 0.0
    %459 = vmatprep.subr.mxu0 0.0
    %460 = vmatpush1.msra.mxu0 0.0
    %461 = vmatprep.subr.mxu0 0.0
    %462 = vmatpush1.msra.mxu0 0.0
    %463 = vmatprep.subr.mxu0 0.0
    %464 = vmatpush1.msra.mxu0 0.0
    %465 = vmatprep.subr.mxu0 0.0
    %466 = vmatpush1.msra.mxu0 0.0
    %467 = vmatprep.subr.mxu0 0.0
    %468 = vmatpush1.msra.mxu0 0.0
    %469 = vmatprep.mubr.f32.mxu0 0.0
    %470 = vmatmul.mubr.f32.gmra.mrb[0].mxu0 %v368
    %v471 = vpop.f32.mrb[0].mxu0
    %v472 = vadd.f32 %v403, %v471
    %v473 = vpop.f32.mrb[0].mxu0
    %474 = vmatprep.mubr.f32.mxu0 0.0
    %475 = vmatmul.mubr.f32.gmra.mrb[0].mxu0 %v371
    %v476 = vpop.f32.mrb[0].mxu0
    %v477 = vadd.f32 %v403, %v476
    %v478 = vpop.f32.mrb[0].mxu0
    %479 = vmatprep.mubr.f32.mxu0 0.0
    %480 = vmatmul.mubr.f32.gmra.mrb[0].mxu0 %v376
    %v481 = vpop.f32.mrb[0].mxu0
    %v482 = vadd.f32 %v403, %v481
    %v483 = vpop.f32.mrb[0].mxu0
    %484 = vmatprep.mubr.f32.mxu0 0.0
    %485 = vmatmul.mubr.f32.gmra.mrb[0].mxu0 %v379
    %v486 = vpop.f32.mrb[0].mxu0
    %v487 = vadd.f32 %v403, %v486
    %v488 = vpop.f32.mrb[0].mxu0
    %489 = vdwg.mxu0
    %v490 = vmax.f32 %v472, 0.0
    %v491 = vmax.f32 %v477, 0.0
    %v492 = vmax.f32 %v482, 0.0
    %v493 = vmax.f32 %v487, 0.0
    %v494 = vld [vmem:[#allocation12] sm:$0xff]
    %v495 = vld [vmem:[#allocation12 + $0x8] sm:$0xff]
    %v496 = vld [vmem:[#allocation12 + $0x10] sm:$0xff]
    %v497 = vld [vmem:[#allocation12 + $0x18] sm:$0xff]
    %v498 = vld [vmem:[#allocation12 + $0x20] sm:$0xff]
    %v499 = vld [vmem:[#allocation12 + $0x28] sm:$0xff]
    %v500 = vld [vmem:[#allocation12 + $0x30] sm:$0xff]
    %v501 = vld [vmem:[#allocation12 + $0x38] sm:$0xff]
    %v502 = vld [vmem:[#allocation12 + $0x40] sm:$0xff]
    %v503 = vld [vmem:[#allocation12 + $0x48] sm:$0xff]
    %v504 = vld [vmem:[#allocation12 + $0x50] sm:$0xff]
    %v505 = vld [vmem:[#allocation12 + $0x58] sm:$0xff]
    %v506 = vld [vmem:[#allocation12 + $0x60] sm:$0xff]
    %v507 = vld [vmem:[#allocation12 + $0x68] sm:$0xff]
    %v508 = vld [vmem:[#allocation12 + $0x70] sm:$0xff]
    %v509 = vld [vmem:[#allocation12 + $0x78] sm:$0xff]
    %v510 = vld [vmem:[#allocation13] sm:$0x1]
    %v512 = vlaneseq
    %v513 = vshrl.u32 %v512, 7
    %v514 = vsub.s32 0, %v513
    %v515 = vrot.slane %v510, %v514
    %517 = vmatprep.subr.mxu0 0.0
    %518 = vmatpush1.msra.mxu0 %v494
    %519 = vmatprep.subr.mxu0 0.0
    %520 = vmatpush1.msra.mxu0 %v495
    %521 = vmatprep.subr.mxu0 0.0
    %522 = vmatpush1.msra.mxu0 %v496
    %523 = vmatprep.subr.mxu0 0.0
    %524 = vmatpush1.msra.mxu0 %v497
    %525 = vmatprep.subr.mxu0 0.0
    %526 = vmatpush1.msra.mxu0 %v498
    %527 = vmatprep.subr.mxu0 0.0
    %528 = vmatpush1.msra.mxu0 %v499
    %529 = vmatprep.subr.mxu0 0.0
    %530 = vmatpush1.msra.mxu0 %v500
    %531 = vmatprep.subr.mxu0 0.0
    %532 = vmatpush1.msra.mxu0 %v501
    %533 = vmatprep.subr.mxu0 0.0
    %534 = vmatpush1.msra.mxu0 %v502
    %535 = vmatprep.subr.mxu0 0.0
    %536 = vmatpush1.msra.mxu0 %v503
    %537 = vmatprep.subr.mxu0 0.0
    %538 = vmatpush1.msra.mxu0 %v504
    %539 = vmatprep.subr.mxu0 0.0
    %540 = vmatpush1.msra.mxu0 %v505
    %541 = vmatprep.subr.mxu0 0.0
    %542 = vmatpush1.msra.mxu0 %v506
    %543 = vmatprep.subr.mxu0 0.0
    %544 = vmatpush1.msra.mxu0 %v507
    %545 = vmatprep.subr.mxu0 0.0
    %546 = vmatpush1.msra.mxu0 %v508
    %547 = vmatprep.subr.mxu0 0.0
    %548 = vmatpush1.msra.mxu0 %v509
    %549 = vmatprep.subr.mxu0 0.0
    %550 = vmatpush1.msra.mxu0 0.0
    %551 = vmatprep.subr.mxu0 0.0
    %552 = vmatpush1.msra.mxu0 0.0
    %553 = vmatprep.subr.mxu0 0.0
    %554 = vmatpush1.msra.mxu0 0.0
    %555 = vmatprep.subr.mxu0 0.0
    %556 = vmatpush1.msra.mxu0 0.0
    %557 = vmatprep.subr.mxu0 0.0
    %558 = vmatpush1.msra.mxu0 0.0
    %559 = vmatprep.subr.mxu0 0.0
    %560 = vmatpush1.msra.mxu0 0.0
    %561 = vmatprep.subr.mxu0 0.0
    %562 = vmatpush1.msra.mxu0 0.0
    %563 = vmatprep.subr.mxu0 0.0
    %564 = vmatpush1.msra.mxu0 0.0
    %565 = vmatprep.subr.mxu0 0.0
    %566 = vmatpush1.msra.mxu0 0.0
    %567 = vmatprep.subr.mxu0 0.0
    %568 = vmatpush1.msra.mxu0 0.0
    %569 = vmatprep.subr.mxu0 0.0
    %570 = vmatpush1.msra.mxu0 0.0
    %571 = vmatprep.subr.mxu0 0.0
    %572 = vmatpush1.msra.mxu0 0.0
    %573 = vmatprep.subr.mxu0 0.0
    %574 = vmatpush1.msra.mxu0 0.0
    %575 = vmatprep.subr.mxu0 0.0
    %576 = vmatpush1.msra.mxu0 0.0
    %577 = vmatprep.subr.mxu0 0.0
    %578 = vmatpush1.msra.mxu0 0.0
    %579 = vmatprep.subr.mxu0 0.0
    %580 = vmatpush1.msra.mxu0 0.0
    %581 = vmatprep.mubr.f32.mxu0 0.0
    %582 = vmatmul.mubr.f32.gmra.mrb[0].mxu0 %v490
    %v583 = vpop.f32.mrb[0].mxu0
    %v584 = vadd.f32 %v515, %v583
    %v585 = vpop.f32.mrb[0].mxu0
    %586 = vmatprep.mubr.f32.mxu0 0.0
    %587 = vmatmul.mubr.f32.gmra.mrb[0].mxu0 %v491
    %v588 = vpop.f32.mrb[0].mxu0
    %v589 = vadd.f32 %v515, %v588
    %v590 = vpop.f32.mrb[0].mxu0
    %591 = vmatprep.mubr.f32.mxu0 0.0
    %592 = vmatmul.mubr.f32.gmra.mrb[0].mxu0 %v492
    %v593 = vpop.f32.mrb[0].mxu0
    %v594 = vadd.f32 %v515, %v593
    %v595 = vpop.f32.mrb[0].mxu0
    %596 = vmatprep.mubr.f32.mxu0 0.0
    %597 = vmatmul.mubr.f32.gmra.mrb[0].mxu0 %v493
    %v598 = vpop.f32.mrb[0].mxu0
    %v599 = vadd.f32 %v515, %v598
    %v600 = vpop.f32.mrb[0].mxu0
    %601 = vdwg.mxu0
    %v602 = vadd.f32 %v584, %v589
    %v603 = vadd.f32 %v602, %v594
    %v604 = vadd.f32 %v603, %v599
    %v605 = vrot.slane %v604, 4
    %v606 = vadd.f32 %v604, %v605
    %v607 = vrot.slane %v606, 2
    %v608 = vadd.f32 %v606, %v607
    %v609 = vrot.slane %v608, 1
    %v610 = vadd.f32 %v608, %v609
    %v611 = vrcp.pop 32.0
    %v612 = vmul.f32 %v610, %v611
    %v613 = vsub.f32 %v584, %v612
    %v614 = vsub.f32 %v589, %v612
    %v615 = vsub.f32 %v594, %v612
    %v616 = vsub.f32 %v599, %v612
    %v617 = vmul.f32 %v613, %v613
    %v618 = vmul.f32 %v614, %v614
    %v619 = vmul.f32 %v615, %v615
    %v620 = vmul.f32 %v616, %v616
    %v621 = vadd.f32 %v617, %v618
    %v622 = vadd.f32 %v621, %v619
    %v623 = vadd.f32 %v622, %v620
    %v624 = vrot.slane %v623, 4
    %v625 = vadd.f32 %v623, %v624
    %v626 = vrot.slane %v625, 2
    %v627 = vadd.f32 %v625, %v626
    %v628 = vrot.slane %v627, 1
    %v629 = vadd.f32 %v627, %v628
    %v630 = vmul.f32 %v629, %v611
    %v631 = vadd.f32 %v630, 1e-05
    %v632 = vrsqrt.pop %v631
    %v633 = vmul.f32 %v613, %v632
    %v634 = vmul.f32 %v614, %v632
    %v635 = vmul.f32 %v615, %v632
    %v636 = vmul.f32 %v616, %v632
    %v637 = vld [vmem:[#allocation15] sm:$0x1]
    %v639 = vlaneseq
    %v640 = vshrl.u32 %v639, 7
    %v641 = vsub.s32 0, %v640
    %v642 = vrot.slane %v637, %v641
    %v644 = vmul.f32 %v633, %v642
    %v645 = vmul.f32 %v634, %v642
    %v646 = vmul.f32 %v635, %v642
    %v647 = vmul.f32 %v636, %v642
    %v648 = vld [vmem:[#allocation16] sm:$0x1]
    %v650 = vlaneseq
    %v651 = vshrl.u32 %v650, 7
    %v652 = vsub.s32 0, %v651
    %v653 = vrot.slane %v648, %v652
    %v655 = vadd.f32 %v644, %v653
    %v656 = vadd.f32 %v645, %v653
    %v657 = vadd.f32 %v646, %v653
    %v658 = vadd.f32 %v647, %v653
    %v659 = vmax.f32 %v655, 0.0
    %v660 = vmax.f32 %v656, 0.0
    %v661 = vmax.f32 %v657, 0.0
    %v662 = vmax.f32 %v658, 0.0
    %v663 = vpack.c.bf16 %v660, %v659
    %v664 = vpack.c.bf16 %v662, %v661
    %s665 = sld [smem:[#allocation2 + $0x1]]
    %s666 = sadd.f32 %s665, 1.0
    %v667 = vstv %s666
    %v668 = vmul.f32 %v667, %v659
    %v669 = vmul.f32 %v667, %v660
    %v670 = vmul.f32 %v667, %v661
    %v671 = vmul.f32 %v667, %v662
    %672 = vmatprep.subr.bf16.mxu0 0
    %673 = vmatpush1.bf16.msra.mxu0 %v663
    %674 = vmatprep.subr.bf16.mxu0 0
    %675 = vmatpush1.bf16.msra.mxu0 %v664
    %676 = vmatprep.subr.bf16.mxu0 0
    %677 = vmatpush1.bf16.msra.mxu0 0
    %678 = vmatprep.subr.bf16.mxu0 0
    %679 = vmatpush1.bf16.msra.mxu0 0
    %680 = vmatprep.subr.bf16.mxu0 0
    %681 = vmatpush1.bf16.msra.mxu0 0
    %682 = vmatprep.subr.bf16.mxu0 0
    %683 = vmatpush1.bf16.msra.mxu0 0
    %684 = vmatprep.subr.bf16.mxu0 0
    %685 = vmatpush1.bf16.msra.mxu0 0
    %686 = vmatprep.subr.bf16.mxu0 0
    %687 = vmatpush1.bf16.msra.mxu0 0
    %688 = vmatprep.subr.bf16.mxu0 0
    %689 = vmatpush1.bf16.msra.mxu0 0
    %690 = vmatprep.subr.bf16.mxu0 0
    %691 = vmatpush1.bf16.msra.mxu0 0
    %692 = vmatprep.subr.bf16.mxu0 0
    %693 = vmatpush1.bf16.msra.mxu0 0
    %694 = vmatprep.subr.bf16.mxu0 0
    %695 = vmatpush1.bf16.msra.mxu0 0
    %696 = vmatprep.subr.bf16.mxu0 0
    %697 = vmatpush1.bf16.msra.mxu0 0
    %698 = vmatprep.subr.bf16.mxu0 0
    %699 = vmatpush1.bf16.msra.mxu0 0
    %700 = vmatprep.subr.bf16.mxu0 0
    %701 = vmatpush1.bf16.msra.mxu0 0
    %702 = vmatprep.subr.bf16.mxu0 0
    %703 = vmatpush1.bf16.msra.mxu0 0
    %704 = vmatprep.mubr.bf16.mxu0 0
    %705 = vmatmul.mubr.bf16.gmra.mrb[0].mxu0 %v328
    %v706 = vpop.f32.mrb[0].mxu0
    %v707 = vadd.f32 %v668, %v706
    %v708 = vpop.f32.mrb[0].mxu0
    %v709 = vpop.f32.mrb[0].mxu0
    %v710 = vadd.f32 %v669, %v709
    %v711 = vpop.f32.mrb[0].mxu0
    %712 = vmatprep.mubr.bf16.mxu0 0
    %713 = vmatmul.mubr.bf16.gmra.mrb[0].mxu0 %v331
    %v714 = vpop.f32.mrb[0].mxu0
    %v715 = vadd.f32 %v670, %v714
    %v716 = vpop.f32.mrb[0].mxu0
    %v717 = vpop.f32.mrb[0].mxu0
    %v718 = vadd.f32 %v671, %v717
    %v719 = vpop.f32.mrb[0].mxu0
    %720 = vdwg.mxu0
    %v721 = vld [vmem:[#allocation18] sm:$0xff]
    %v722 = vld [vmem:[#allocation18 + $0x8] sm:$0xff]
    %v723 = vld [vmem:[#allocation18 + $0x10] sm:$0xff]
    %v724 = vld [vmem:[#allocation18 + $0x18] sm:$0xff]
    %v725 = vld [vmem:[#allocation18 + $0x20] sm:$0xff]
    %v726 = vld [vmem:[#allocation18 + $0x28] sm:$0xff]
    %v727 = vld [vmem:[#allocation18 + $0x30] sm:$0xff]
    %v728 = vld [vmem:[#allocation18 + $0x38] sm:$0xff]
    %v729 = vld [vmem:[#allocation18 + $0x40] sm:$0xff]
    %v730 = vld [vmem:[#allocation18 + $0x48] sm:$0xff]
    %v731 = vld [vmem:[#allocation18 + $0x50] sm:$0xff]
    %v732 = vld [vmem:[#allocation18 + $0x58] sm:$0xff]
    %v733 = vld [vmem:[#allocation18 + $0x60] sm:$0xff]
    %v734 = vld [vmem:[#allocation18 + $0x68] sm:$0xff]
    %v735 = vld [vmem:[#allocation18 + $0x70] sm:$0xff]
    %v736 = vld [vmem:[#allocation18 + $0x78] sm:$0xff]
    %v737 = vld [vmem:[#allocation19] sm:$0x1]
    %v739 = vlaneseq
    %v740 = vshrl.u32 %v739, 7
    %v741 = vsub.s32 0, %v740
    %v742 = vrot.slane %v737, %v741
    %744 = vmatprep.subr.mxu0 0.0
    %745 = vmatpush1.msra.mxu0 %v721
    %746 = vmatprep.subr.mxu0 0.0
    %747 = vmatpush1.msra.mxu0 %v722
    %748 = vmatprep.subr.mxu0 0.0
    %749 = vmatpush1.msra.mxu0 %v723
    %750 = vmatprep.subr.mxu0 0.0
    %751 = vmatpush1.msra.mxu0 %v724
    %752 = vmatprep.subr.mxu0 0.0
    %753 = vmatpush1.msra.mxu0 %v725
    %754 = vmatprep.subr.mxu0 0.0
    %755 = vmatpush1.msra.mxu0 %v726
    %756 = vmatprep.subr.mxu0 0.0
    %757 = vmatpush1.msra.mxu0 %v727
    %758 = vmatprep.subr.mxu0 0.0
    %759 = vmatpush1.msra.mxu0 %v728
    %760 = vmatprep.subr.mxu0 0.0
    %761 = vmatpush1.msra.mxu0 %v729
    %762 = vmatprep.subr.mxu0 0.0
    %763 = vmatpush1.msra.mxu0 %v730
    %764 = vmatprep.subr.mxu0 0.0
    %765 = vmatpush1.msra.mxu0 %v731
    %766 = vmatprep.subr.mxu0 0.0
    %767 = vmatpush1.msra.mxu0 %v732
    %768 = vmatprep.subr.mxu0 0.0
    %769 = vmatpush1.msra.mxu0 %v733
    %770 = vmatprep.subr.mxu0 0.0
    %771 = vmatpush1.msra.mxu0 %v734
    %772 = vmatprep.subr.mxu0 0.0
    %773 = vmatpush1.msra.mxu0 %v735
    %774 = vmatprep.subr.mxu0 0.0
    %775 = vmatpush1.msra.mxu0 %v736
    %776 = vmatprep.subr.mxu0 0.0
    %777 = vmatpush1.msra.mxu0 0.0
    %778 = vmatprep.subr.mxu0 0.0
    %779 = vmatpush1.msra.mxu0 0.0
    %780 = vmatprep.subr.mxu0 0.0
    %781 = vmatpush1.msra.mxu0 0.0
    %782 = vmatprep.subr.mxu0 0.0
    %783 = vmatpush1.msra.mxu0 0.0
    %784 = vmatprep.subr.mxu0 0.0
    %785 = vmatpush1.msra.mxu0 0.0
    %786 = vmatprep.subr.mxu0 0.0
    %787 = vmatpush1.msra.mxu0 0.0
    %788 = vmatprep.subr.mxu0 0.0
    %789 = vmatpush1.msra.mxu0 0.0
    %790 = vmatprep.subr.mxu0 0.0
    %791 = vmatpush1.msra.mxu0 0.0
    %792 = vmatprep.subr.mxu0 0.0
    %793 = vmatpush1.msra.mxu0 0.0
    %794 = vmatprep.subr.mxu0 0.0
    %795 = vmatpush1.msra.mxu0 0.0
    %796 = vmatprep.subr.mxu0 0.0
    %797 = vmatpush1.msra.mxu0 0.0
    %798 = vmatprep.subr.mxu0 0.0
    %799 = vmatpush1.msra.mxu0 0.0
    %800 = vmatprep.subr.mxu0 0.0
    %801 = vmatpush1.msra.mxu0 0.0
    %802 = vmatprep.subr.mxu0 0.0
    %803 = vmatpush1.msra.mxu0 0.0
    %804 = vmatprep.subr.mxu0 0.0
    %805 = vmatpush1.msra.mxu0 0.0
    %806 = vmatprep.subr.mxu0 0.0
    %807 = vmatpush1.msra.mxu0 0.0
    %808 = vmatprep.mubr.f32.mxu0 0.0
    %809 = vmatmul.mubr.f32.gmra.mrb[0].mxu0 %v707
    %v810 = vpop.f32.mrb[0].mxu0
    %v811 = vadd.f32 %v742, %v810
    %v812 = vpop.f32.mrb[0].mxu0
    %813 = vmatprep.mubr.f32.mxu0 0.0
    %814 = vmatmul.mubr.f32.gmra.mrb[0].mxu0 %v710
    %v815 = vpop.f32.mrb[0].mxu0
    %v816 = vadd.f32 %v742, %v815
    %v817 = vpop.f32.mrb[0].mxu0
    %818 = vmatprep.mubr.f32.mxu0 0.0
    %819 = vmatmul.mubr.f32.gmra.mrb[0].mxu0 %v715
    %v820 = vpop.f32.mrb[0].mxu0
    %v821 = vadd.f32 %v742, %v820
    %v822 = vpop.f32.mrb[0].mxu0
    %823 = vmatprep.mubr.f32.mxu0 0.0
    %824 = vmatmul.mubr.f32.gmra.mrb[0].mxu0 %v718
    %v825 = vpop.f32.mrb[0].mxu0
    %v826 = vadd.f32 %v742, %v825
    %v827 = vpop.f32.mrb[0].mxu0
    %828 = vdwg.mxu0
    %v829 = vmax.f32 %v811, 0.0
    %v830 = vmax.f32 %v816, 0.0
    %v831 = vmax.f32 %v821, 0.0
    %v832 = vmax.f32 %v826, 0.0
    %v833 = vld [vmem:[#allocation21] sm:$0xff]
    %v834 = vld [vmem:[#allocation21 + $0x8] sm:$0xff]
    %v835 = vld [vmem:[#allocation21 + $0x10] sm:$0xff]
    %v836 = vld [vmem:[#allocation21 + $0x18] sm:$0xff]
    %v837 = vld [vmem:[#allocation21 + $0x20] sm:$0xff]
    %v838 = vld [vmem:[#allocation21 + $0x28] sm:$0xff]
    %v839 = vld [vmem:[#allocation21 + $0x30] sm:$0xff]
    %v840 = vld [vmem:[#allocation21 + $0x38] sm:$0xff]
    %v841 = vld [vmem:[#allocation21 + $0x40] sm:$0xff]
    %v842 = vld [vmem:[#allocation21 + $0x48] sm:$0xff]
    %v843 = vld [vmem:[#allocation21 + $0x50] sm:$0xff]
    %v844 = vld [vmem:[#allocation21 + $0x58] sm:$0xff]
    %v845 = vld [vmem:[#allocation21 + $0x60] sm:$0xff]
    %v846 = vld [vmem:[#allocation21 + $0x68] sm:$0xff]
    %v847 = vld [vmem:[#allocation21 + $0x70] sm:$0xff]
    %v848 = vld [vmem:[#allocation21 + $0x78] sm:$0xff]
    %v849 = vld [vmem:[#allocation22] sm:$0x1]
    %v851 = vlaneseq
    %v852 = vshrl.u32 %v851, 7
    %v853 = vsub.s32 0, %v852
    %v854 = vrot.slane %v849, %v853
    %856 = vmatprep.subr.mxu0 0.0
    %857 = vmatpush1.msra.mxu0 %v833
    %858 = vmatprep.subr.mxu0 0.0
    %859 = vmatpush1.msra.mxu0 %v834
    %860 = vmatprep.subr.mxu0 0.0
    %861 = vmatpush1.msra.mxu0 %v835
    %862 = vmatprep.subr.mxu0 0.0
    %863 = vmatpush1.msra.mxu0 %v836
    %864 = vmatprep.subr.mxu0 0.0
    %865 = vmatpush1.msra.mxu0 %v837
    %866 = vmatprep.subr.mxu0 0.0
    %867 = vmatpush1.msra.mxu0 %v838
    %868 = vmatprep.subr.mxu0 0.0
    %869 = vmatpush1.msra.mxu0 %v839
    %870 = vmatprep.subr.mxu0 0.0
    %871 = vmatpush1.msra.mxu0 %v840
    %872 = vmatprep.subr.mxu0 0.0
    %873 = vmatpush1.msra.mxu0 %v841
    %874 = vmatprep.subr.mxu0 0.0
    %875 = vmatpush1.msra.mxu0 %v842
    %876 = vmatprep.subr.mxu0 0.0
    %877 = vmatpush1.msra.mxu0 %v843
    %878 = vmatprep.subr.mxu0 0.0
    %879 = vmatpush1.msra.mxu0 %v844
    %880 = vmatprep.subr.mxu0 0.0
    %881 = vmatpush1.msra.mxu0 %v845
    %882 = vmatprep.subr.mxu0 0.0
    %883 = vmatpush1.msra.mxu0 %v846
    %884 = vmatprep.subr.mxu0 0.0
    %885 = vmatpush1.msra.mxu0 %v847
    %886 = vmatprep.subr.mxu0 0.0
    %887 = vmatpush1.msra.mxu0 %v848
    %888 = vmatprep.subr.mxu0 0.0
    %889 = vmatpush1.msra.mxu0 0.0
    %890 = vmatprep.subr.mxu0 0.0
    %891 = vmatpush1.msra.mxu0 0.0
    %892 = vmatprep.subr.mxu0 0.0
    %893 = vmatpush1.msra.mxu0 0.0
    %894 = vmatprep.subr.mxu0 0.0
    %895 = vmatpush1.msra.mxu0 0.0
    %896 = vmatprep.subr.mxu0 0.0
    %897 = vmatpush1.msra.mxu0 0.0
    %898 = vmatprep.subr.mxu0 0.0
    %899 = vmatpush1.msra.mxu0 0.0
    %900 = vmatprep.subr.mxu0 0.0
    %901 = vmatpush1.msra.mxu0 0.0
    %902 = vmatprep.subr.mxu0 0.0
    %903 = vmatpush1.msra.mxu0 0.0
    %904 = vmatprep.subr.mxu0 0.0
    %905 = vmatpush1.msra.mxu0 0.0
    %906 = vmatprep.subr.mxu0 0.0
    %907 = vmatpush1.msra.mxu0 0.0
    %908 = vmatprep.subr.mxu0 0.0
    %909 = vmatpush1.msra.mxu0 0.0
    %910 = vmatprep.subr.mxu0 0.0
    %911 = vmatpush1.msra.mxu0 0.0
    %912 = vmatprep.subr.mxu0 0.0
    %913 = vmatpush1.msra.mxu0 0.0
    %914 = vmatprep.subr.mxu0 0.0
    %915 = vmatpush1.msra.mxu0 0.0
    %916 = vmatprep.subr.mxu0 0.0
    %917 = vmatpush1.msra.mxu0 0.0
    %918 = vmatprep.subr.mxu0 0.0
    %919 = vmatpush1.msra.mxu0 0.0
    %920 = vmatprep.mubr.f32.mxu0 0.0
    %921 = vmatmul.mubr.f32.gmra.mrb[0].mxu0 %v829
    %v922 = vpop.f32.mrb[0].mxu0
    %v923 = vadd.f32 %v854, %v922
    %v924 = vpop.f32.mrb[0].mxu0
    %925 = vmatprep.mubr.f32.mxu0 0.0
    %926 = vmatmul.mubr.f32.gmra.mrb[0].mxu0 %v830
    %v927 = vpop.f32.mrb[0].mxu0
    %v928 = vadd.f32 %v854, %v927
    %v929 = vpop.f32.mrb[0].mxu0
    %930 = vmatprep.mubr.f32.mxu0 0.0
    %931 = vmatmul.mubr.f32.gmra.mrb[0].mxu0 %v831
    %v932 = vpop.f32.mrb[0].mxu0
    %v933 = vadd.f32 %v854, %v932
    %v934 = vpop.f32.mrb[0].mxu0
    %935 = vmatprep.mubr.f32.mxu0 0.0
    %936 = vmatmul.mubr.f32.gmra.mrb[0].mxu0 %v832
    %v937 = vpop.f32.mrb[0].mxu0
    %v938 = vadd.f32 %v854, %v937
    %v939 = vpop.f32.mrb[0].mxu0
    %940 = vdwg.mxu0
    %v941 = vadd.f32 %v923, %v928
    %v942 = vadd.f32 %v941, %v933
    %v943 = vadd.f32 %v942, %v938
    %v944 = vrot.slane %v943, 4
    %v945 = vadd.f32 %v943, %v944
    %v946 = vrot.slane %v945, 2
    %v947 = vadd.f32 %v945, %v946
    %v948 = vrot.slane %v947, 1
    %v949 = vadd.f32 %v947, %v948
    %v950 = vmul.f32 %v949, %v611
    %v951 = vsub.f32 %v923, %v950
    %v952 = vsub.f32 %v928, %v950
    %v953 = vsub.f32 %v933, %v950
    %v954 = vsub.f32 %v938, %v950
    %v955 = vmul.f32 %v951, %v951
    %v956 = vmul.f32 %v952, %v952
    %v957 = vmul.f32 %v953, %v953
    %v958 = vmul.f32 %v954, %v954
    %v959 = vadd.f32 %v955, %v956
    %v960 = vadd.f32 %v959, %v957
    %v961 = vadd.f32 %v960, %v958
    %v962 = vrot.slane %v961, 4
    %v963 = vadd.f32 %v961, %v962
    %v964 = vrot.slane %v963, 2
    %v965 = vadd.f32 %v963, %v964
    %v966 = vrot.slane %v965, 1
    %v967 = vadd.f32 %v965, %v966
    %v968 = vmul.f32 %v967, %v611
    %v969 = vadd.f32 %v968, 1e-05
    %v970 = vrsqrt.pop %v969
    %v971 = vmul.f32 %v951, %v970
    %v972 = vmul.f32 %v952, %v970
    %v973 = vmul.f32 %v953, %v970
    %v974 = vmul.f32 %v954, %v970
    %v975 = vld [vmem:[#allocation24] sm:$0x1]
    %v977 = vlaneseq
    %v978 = vshrl.u32 %v977, 7
    %v979 = vsub.s32 0, %v978
    %v980 = vrot.slane %v975, %v979
    %v982 = vmul.f32 %v971, %v980
    %v983 = vmul.f32 %v972, %v980
    %v984 = vmul.f32 %v973, %v980
    %v985 = vmul.f32 %v974, %v980
    %v986 = vld [vmem:[#allocation25] sm:$0x1]
    %v988 = vlaneseq
    %v989 = vshrl.u32 %v988, 7
    %v990 = vsub.s32 0, %v989
    %v991 = vrot.slane %v986, %v990
    %v993 = vadd.f32 %v982, %v991
    %v994 = vadd.f32 %v983, %v991
    %v995 = vadd.f32 %v984, %v991
    %v996 = vadd.f32 %v985, %v991
    %v997 = vmax.f32 %v993, 0.0
    %v998 = vmax.f32 %v994, 0.0
    %v999 = vmax.f32 %v995, 0.0
    %v1000 = vmax.f32 %v996, 0.0
    %v1001 = vld [vmem:[#allocation27] sm:$0xff]
    %v1002 = vld [vmem:[#allocation27 + $0x8] sm:$0xff]
    %v1003 = vld [vmem:[#allocation27 + $0x10] sm:$0xff]
    %v1004 = vld [vmem:[#allocation27 + $0x18] sm:$0xff]
    %v1005 = vld [vmem:[#allocation27 + $0x20] sm:$0xff]
    %v1006 = vld [vmem:[#allocation27 + $0x28] sm:$0xff]
    %v1007 = vld [vmem:[#allocation27 + $0x30] sm:$0xff]
    %v1008 = vld [vmem:[#allocation27 + $0x38] sm:$0xff]
    %v1009 = vld [vmem:[#allocation27 + $0x40] sm:$0xff]
    %v1010 = vld [vmem:[#allocation27 + $0x48] sm:$0xff]
    %v1011 = vld [vmem:[#allocation27 + $0x50] sm:$0xff]
    %v1012 = vld [vmem:[#allocation27 + $0x58] sm:$0xff]
    %v1013 = vld [vmem:[#allocation27 + $0x60] sm:$0xff]
    %v1014 = vld [vmem:[#allocation27 + $0x68] sm:$0xff]
    %v1015 = vld [vmem:[#allocation27 + $0x70] sm:$0xff]
    %v1016 = vld [vmem:[#allocation27 + $0x78] sm:$0xff]
    %v1017 = vld [vmem:[#allocation28] sm:$0x1]
    %v1019 = vlaneseq
    %v1020 = vshrl.u32 %v1019, 7
    %v1021 = vsub.s32 0, %v1020
    %v1022 = vrot.slane %v1017, %v1021
    %1024 = vmatprep.subr.mxu0 0.0
    %1025 = vmatpush1.msra.mxu0 %v1001
    %1026 = vmatprep.subr.mxu0 0.0
    %1027 = vmatpush1.msra.mxu0 %v1002
    %1028 = vmatprep.subr.mxu0 0.0
    %1029 = vmatpush1.msra.mxu0 %v1003
    %1030 = vmatprep.subr.mxu0 0.0
    %1031 = vmatpush1.msra.mxu0 %v1004
    %1032 = vmatprep.subr.mxu0 0.0
    %1033 = vmatpush1.msra.mxu0 %v1005
    %1034 = vmatprep.subr.mxu0 0.0
    %1035 = vmatpush1.msra.mxu0 %v1006
    %1036 = vmatprep.subr.mxu0 0.0
    %1037 = vmatpush1.msra.mxu0 %v1007
    %1038 = vmatprep.subr.mxu0 0.0
    %1039 = vmatpush1.msra.mxu0 %v1008
    %1040 = vmatprep.subr.mxu0 0.0
    %1041 = vmatpush1.msra.mxu0 %v1009
    %1042 = vmatprep.subr.mxu0 0.0
    %1043 = vmatpush1.msra.mxu0 %v1010
    %1044 = vmatprep.subr.mxu0 0.0
    %1045 = vmatpush1.msra.mxu0 %v1011
    %1046 = vmatprep.subr.mxu0 0.0
    %1047 = vmatpush1.msra.mxu0 %v1012
    %1048 = vmatprep.subr.mxu0 0.0
    %1049 = vmatpush1.msra.mxu0 %v1013
    %1050 = vmatprep.subr.mxu0 0.0
    %1051 = vmatpush1.msra.mxu0 %v1014
    %1052 = vmatprep.subr.mxu0 0.0
    %1053 = vmatpush1.msra.mxu0 %v1015
    %1054 = vmatprep.subr.mxu0 0.0
    %1055 = vmatpush1.msra.mxu0 %v1016
    %1056 = vmatprep.subr.mxu0 0.0
    %1057 = vmatpush1.msra.mxu0 0.0
    %1058 = vmatprep.subr.mxu0 0.0
    %1059 = vmatpush1.msra.mxu0 0.0
    %1060 = vmatprep.subr.mxu0 0.0
    %1061 = vmatpush1.msra.mxu0 0.0
    %1062 = vmatprep.subr.mxu0 0.0
    %1063 = vmatpush1.msra.mxu0 0.0
    %1064 = vmatprep.subr.mxu0 0.0
    %1065 = vmatpush1.msra.mxu0 0.0
    %1066 = vmatprep.subr.mxu0 0.0
    %1067 = vmatpush1.msra.mxu0 0.0
    %1068 = vmatprep.subr.mxu0 0.0
    %1069 = vmatpush1.msra.mxu0 0.0
    %1070 = vmatprep.subr.mxu0 0.0
    %1071 = vmatpush1.msra.mxu0 0.0
    %1072 = vmatprep.subr.mxu0 0.0
    %1073 = vmatpush1.msra.mxu0 0.0
    %1074 = vmatprep.subr.mxu0 0.0
    %1075 = vmatpush1.msra.mxu0 0.0
    %1076 = vmatprep.subr.mxu0 0.0
    %1077 = vmatpush1.msra.mxu0 0.0
    %1078 = vmatprep.subr.mxu0 0.0
    %1079 = vmatpush1.msra.mxu0 0.0
    %1080 = vmatprep.subr.mxu0 0.0
    %1081 = vmatpush1.msra.mxu0 0.0
    %1082 = vmatprep.subr.mxu0 0.0
    %1083 = vmatpush1.msra.mxu0 0.0
    %1084 = vmatprep.subr.mxu0 0.0
    %1085 = vmatpush1.msra.mxu0 0.0
    %1086 = vmatprep.subr.mxu0 0.0
    %1087 = vmatpush1.msra.mxu0 0.0
    %1088 = vmatprep.mubr.f32.mxu0 0.0
    %1089 = vmatmul.mubr.f32.gmra.mrb[0].mxu0 %v997
    %v1090 = vpop.f32.mrb[0].mxu0
    %v1091 = vadd.f32 %v1022, %v1090
    %v1092 = vpop.f32.mrb[0].mxu0
    %1093 = vmatprep.mubr.f32.mxu0 0.0
    %1094 = vmatmul.mubr.f32.gmra.mrb[0].mxu0 %v998
    %v1095 = vpop.f32.mrb[0].mxu0
    %v1096 = vadd.f32 %v1022, %v1095
    %v1097 = vpop.f32.mrb[0].mxu0
    %1098 = vmatprep.mubr.f32.mxu0 0.0
    %1099 = vmatmul.mubr.f32.gmra.mrb[0].mxu0 %v999
    %v1100 = vpop.f32.mrb[0].mxu0
    %v1101 = vadd.f32 %v1022, %v1100
    %v1102 = vpop.f32.mrb[0].mxu0
    %1103 = vmatprep.mubr.f32.mxu0 0.0
    %1104 = vmatmul.mubr.f32.gmra.mrb[0].mxu0 %v1000
    %v1105 = vpop.f32.mrb[0].mxu0
    %v1106 = vadd.f32 %v1022, %v1105
    %v1107 = vpop.f32.mrb[0].mxu0
    %1108 = vdwg.mxu0
    %v1109 = vmax.f32 %v1091, 0.0
    %v1110 = vmax.f32 %v1096, 0.0
    %v1111 = vmax.f32 %v1101, 0.0
    %v1112 = vmax.f32 %v1106, 0.0
    %v1113 = vld [vmem:[#allocation30] sm:$0xff]
    %v1114 = vld [vmem:[#allocation30 + $0x8] sm:$0xff]
    %v1115 = vld [vmem:[#allocation30 + $0x10] sm:$0xff]
    %v1116 = vld [vmem:[#allocation30 + $0x18] sm:$0xff]
    %v1117 = vld [vmem:[#allocation30 + $0x20] sm:$0xff]
    %v1118 = vld [vmem:[#allocation30 + $0x28] sm:$0xff]
    %v1119 = vld [vmem:[#allocation30 + $0x30] sm:$0xff]
    %v1120 = vld [vmem:[#allocation30 + $0x38] sm:$0xff]
    %v1121 = vld [vmem:[#allocation30 + $0x40] sm:$0xff]
    %v1122 = vld [vmem:[#allocation30 + $0x48] sm:$0xff]
    %v1123 = vld [vmem:[#allocation30 + $0x50] sm:$0xff]
    %v1124 = vld [vmem:[#allocation30 + $0x58] sm:$0xff]
    %v1125 = vld [vmem:[#allocation30 + $0x60] sm:$0xff]
    %v1126 = vld [vmem:[#allocation30 + $0x68] sm:$0xff]
    %v1127 = vld [vmem:[#allocation30 + $0x70] sm:$0xff]
    %v1128 = vld [vmem:[#allocation30 + $0x78] sm:$0xff]
    %v1129 = vld [vmem:[#allocation31] sm:$0x1]
    %v1131 = vlaneseq
    %v1132 = vshrl.u32 %v1131, 7
    %v1133 = vsub.s32 0, %v1132
    %v1134 = vrot.slane %v1129, %v1133
    %1136 = vmatprep.subr.mxu0 0.0
    %1137 = vmatpush1.msra.mxu0 %v1113
    %1138 = vmatprep.subr.mxu0 0.0
    %1139 = vmatpush1.msra.mxu0 %v1114
    %1140 = vmatprep.subr.mxu0 0.0
    %1141 = vmatpush1.msra.mxu0 %v1115
    %1142 = vmatprep.subr.mxu0 0.0
    %1143 = vmatpush1.msra.mxu0 %v1116
    %1144 = vmatprep.subr.mxu0 0.0
    %1145 = vmatpush1.msra.mxu0 %v1117
    %1146 = vmatprep.subr.mxu0 0.0
    %1147 = vmatpush1.msra.mxu0 %v1118
    %1148 = vmatprep.subr.mxu0 0.0
    %1149 = vmatpush1.msra.mxu0 %v1119
    %1150 = vmatprep.subr.mxu0 0.0
    %1151 = vmatpush1.msra.mxu0 %v1120
    %1152 = vmatprep.subr.mxu0 0.0
    %1153 = vmatpush1.msra.mxu0 %v1121
    %1154 = vmatprep.subr.mxu0 0.0
    %1155 = vmatpush1.msra.mxu0 %v1122
    %1156 = vmatprep.subr.mxu0 0.0
    %1157 = vmatpush1.msra.mxu0 %v1123
    %1158 = vmatprep.subr.mxu0 0.0
    %1159 = vmatpush1.msra.mxu0 %v1124
    %1160 = vmatprep.subr.mxu0 0.0
    %1161 = vmatpush1.msra.mxu0 %v1125
    %1162 = vmatprep.subr.mxu0 0.0
    %1163 = vmatpush1.msra.mxu0 %v1126
    %1164 = vmatprep.subr.mxu0 0.0
    %1165 = vmatpush1.msra.mxu0 %v1127
    %1166 = vmatprep.subr.mxu0 0.0
    %1167 = vmatpush1.msra.mxu0 %v1128
    %1168 = vmatprep.subr.mxu0 0.0
    %1169 = vmatpush1.msra.mxu0 0.0
    %1170 = vmatprep.subr.mxu0 0.0
    %1171 = vmatpush1.msra.mxu0 0.0
    %1172 = vmatprep.subr.mxu0 0.0
    %1173 = vmatpush1.msra.mxu0 0.0
    %1174 = vmatprep.subr.mxu0 0.0
    %1175 = vmatpush1.msra.mxu0 0.0
    %1176 = vmatprep.subr.mxu0 0.0
    %1177 = vmatpush1.msra.mxu0 0.0
    %1178 = vmatprep.subr.mxu0 0.0
    %1179 = vmatpush1.msra.mxu0 0.0
    %1180 = vmatprep.subr.mxu0 0.0
    %1181 = vmatpush1.msra.mxu0 0.0
    %1182 = vmatprep.subr.mxu0 0.0
    %1183 = vmatpush1.msra.mxu0 0.0
    %1184 = vmatprep.subr.mxu0 0.0
    %1185 = vmatpush1.msra.mxu0 0.0
    %1186 = vmatprep.subr.mxu0 0.0
    %1187 = vmatpush1.msra.mxu0 0.0
    %1188 = vmatprep.subr.mxu0 0.0
    %1189 = vmatpush1.msra.mxu0 0.0
    %1190 = vmatprep.subr.mxu0 0.0
    %1191 = vmatpush1.msra.mxu0 0.0
    %1192 = vmatprep.subr.mxu0 0.0
    %1193 = vmatpush1.msra.mxu0 0.0
    %1194 = vmatprep.subr.mxu0 0.0
    %1195 = vmatpush1.msra.mxu0 0.0
    %1196 = vmatprep.subr.mxu0 0.0
    %1197 = vmatpush1.msra.mxu0 0.0
    %1198 = vmatprep.subr.mxu0 0.0
    %1199 = vmatpush1.msra.mxu0 0.0
    %1200 = vmatprep.mubr.f32.mxu0 0.0
    %1201 = vmatmul.mubr.f32.gmra.mrb[0].mxu0 %v1109
    %v1202 = vpop.f32.mrb[0].mxu0
    %v1203 = vadd.f32 %v1134, %v1202
    %v1204 = vpop.f32.mrb[0].mxu0
    %1205 = vmatprep.mubr.f32.mxu0 0.0
    %1206 = vmatmul.mubr.f32.gmra.mrb[0].mxu0 %v1110
    %v1207 = vpop.f32.mrb[0].mxu0
    %v1208 = vadd.f32 %v1134, %v1207
    %v1209 = vpop.f32.mrb[0].mxu0
    %1210 = vmatprep.mubr.f32.mxu0 0.0
    %1211 = vmatmul.mubr.f32.gmra.mrb[0].mxu0 %v1111
    %v1212 = vpop.f32.mrb[0].mxu0
    %v1213 = vadd.f32 %v1134, %v1212
    %v1214 = vpop.f32.mrb[0].mxu0
    %1215 = vmatprep.mubr.f32.mxu0 0.0
    %1216 = vmatmul.mubr.f32.gmra.mrb[0].mxu0 %v1112
    %v1217 = vpop.f32.mrb[0].mxu0
    %v1218 = vadd.f32 %v1134, %v1217
    %v1219 = vpop.f32.mrb[0].mxu0
    %1220 = vdwg.mxu0
    %1221 = vst [vmem:[#allocation33] sm:$0xff] %v1203
    %1222 = vst [vmem:[#allocation33 + $0x8] sm:$0xff] %v1208
    %1223 = vst [vmem:[#allocation33 + $0x10] sm:$0xff] %v1213
    %1224 = vst [vmem:[#allocation33 + $0x18] sm:$0xff] %v1218
    // Predicated region
    $region154: #{tpu_custom_call.1} parent=1 // pred_check
      _
    $region155: #{tpu_custom_call.1} parent=1 // pred_check_branch
      %1226 = sbr.rel (0) target = $region157
    $region156: #{tpu_custom_call.1} parent=1 // pred_region
      %s1228 = ssub.s32 512, 512
      %1229 = vsyncadd [#allocation4], %s1228
      %s1230 = sshll.u32 [#allocation33], 4
      %s1231 = int_to_ptr.vmem [resolvable:$true] %s1230
      %1236 = dma.vmem_to_hbm [thread:$0]  %s1231, 512, %s19, [#allocation4], 128, 128, 8
    $region157: #{tpu_custom_call.1} parent=1 // pred_fallthru
      _
    // Predicated region
    $region158: #{tpu_custom_call.1} parent=1 // pred_check
      _
    $region159: #{tpu_custom_call.1} parent=1 // pred_check_branch
      %1238 = sbr.rel (0) target = $region161
    $region160: #{tpu_custom_call.1} parent=1 // pred_region
      %1239 = dma.done [#allocation4], 512
    $region161: #{tpu_custom_call.1} parent=1 // pred_fallthru
      _
    %1240 = vsyncpa [#allocation3], 1
    %1241 = vsyncpa [#allocation8], 1
    %1242 = vsyncpa [#allocation11], 1
    %1243 = vsyncpa [#allocation14], 1
    %1244 = vsyncpa [#allocation17], 1
    %1245 = vsyncpa [#allocation20], 1
    %1246 = vsyncpa [#allocation23], 1
    %1247 = vsyncpa [#allocation26], 1
    %1248 = vsyncpa [#allocation29], 1
    %1249 = vsyncpa [#allocation32], 1
    %1250 = vsyncpa [#allocation4], 1
    %1251 = vsyncpa [#allocation5], 1

</llo_original>
